<compile_context>
chip_gen: v7x
topology: tpu7x:2x2x1
jax: 0.10.0
libtpu: 0.0.40
codegen_flags: <defaults>
</compile_context>

<pallas_src>
import math
import functools

import jax
import jax.numpy as jnp
from jax.experimental import pallas as pl
from jax.experimental.pallas import tpu as pltpu

PAD_IDX = 0

_WEIGHT_NAMES = [
    "wqkv", "bqkv", "wz", "bz",
    "g1", "be1", "w1", "b1", "w2", "b2", "g2", "be2",
]


# ---------------------------------------------------------------------------
# Pallas kernel: the full encoder stack.
# Grid = (batch_tiles, nblocks); batch axis "parallel", layer axis "arbitrary".
# The activation is carried across layers in the resident out_ref window.
# ---------------------------------------------------------------------------
def _encoder_stack_kernel(
    x_ref, bias_ref,
    wqkv_ref, bqkv_ref, wz_ref, bz_ref,
    g1_ref, be1_ref, w1_ref, b1_ref, w2_ref, b2_ref, g2_ref, be2_ref,
    out_ref,
    *, batch_tile, seq, head, q_k_size, v_size,
):
    layer = pl.program_id(1)
    rows = batch_tile * seq
    hd = head * q_k_size          # total query/key width
    hv = head * v_size            # total value width

    # Layer 0: seed the VMEM-resident carry (out_ref) with the embedded input.
    @pl.when(layer == 0)
    def _():
        out_ref[...] = x_ref[...]

    x = out_ref[...]                                            # (rows, E) f32

    # --- fused QKV projection: one bf16 MXU pass, N = 2*hd + hv ------------
    qkv = jnp.dot(x.astype(jnp.bfloat16), wqkv_ref[0],
                  preferred_element_type=jnp.float32) + bqkv_ref[0]
    qkv_bf = qkv.reshape(batch_tile, seq, 2 * hd + hv).astype(jnp.bfloat16)

    # Head-batched q/k/v: stack heads on the leading (batch) axis -> (H*bt,S,d).
    # NOTE: the 1/sqrt(d_k) scale is already folded into Wq / bq at init time.
    q3 = jnp.concatenate(
        [qkv_bf[:, :, h * q_k_size:(h + 1) * q_k_size] for h in range(head)], axis=0)
    k3 = jnp.concatenate(
        [qkv_bf[:, :, hd + h * q_k_size: hd + (h + 1) * q_k_size] for h in range(head)], axis=0)
    v3 = jnp.concatenate(
        [qkv_bf[:, :, 2 * hd + h * v_size: 2 * hd + (h + 1) * v_size] for h in range(head)], axis=0)
    bias_hb = jnp.concatenate([bias_ref[...]] * head, axis=0)    # (H*bt, 1, S)

    # TODO(synk): for large S, block the kv axis (flash-style online softmax)
    # instead of materializing the (H*bt, S, S) score tensor.
    s = jnp.einsum("bqd,bkd->bqk", q3, k3,
                   preferred_element_type=jnp.float32)           # (H*bt, S, S)
    s = s + bias_hb
    s = s - jnp.max(s, axis=-1, keepdims=True)
    p = jnp.exp(s)
    p = p * pl.reciprocal(jnp.sum(p, axis=-1, keepdims=True), approx=True)

    o = jnp.einsum("bqk,bkd->bqd", p.astype(jnp.bfloat16), v3,
                   preferred_element_type=jnp.float32)           # (H*bt, S, dv)
    # re-interleave heads on the lane axis -> (bt, S, hv), then ONE K=hv matmul
    o_cat = jnp.concatenate(
        [o[h * batch_tile:(h + 1) * batch_tile] for h in range(head)], axis=-1)
    z = jnp.dot(o_cat.reshape(rows, hv).astype(jnp.bfloat16), wz_ref[0],
                preferred_element_type=jnp.float32) + bz_ref[0]

    # --- add & norm 1 (one-pass stats) --------------------------------------
    r1 = z + x
    mu1 = jnp.mean(r1, axis=-1, keepdims=True)
    var1 = jnp.mean(r1 * r1, axis=-1, keepdims=True) - mu1 * mu1
    o1 = (r1 - mu1) * jax.lax.rsqrt(var1 + 1e-5) * g1_ref[0] + be1_ref[0]

    # --- feed-forward --------------------------------------------------------
    h1 = jnp.maximum(
        jnp.dot(o1.astype(jnp.bfloat16), w1_ref[0],
                preferred_element_type=jnp.float32) + b1_ref[0], 0.0)
    ff = jnp.dot(h1.astype(jnp.bfloat16), w2_ref[0],
                 preferred_element_type=jnp.float32) + b2_ref[0]

    # --- add & norm 2 (one-pass stats) ---------------------------------------
    r2 = ff + o1
    mu2 = jnp.mean(r2, axis=-1, keepdims=True)
    var2 = jnp.mean(r2 * r2, axis=-1, keepdims=True) - mu2 * mu2
    y = (r2 - mu2) * jax.lax.rsqrt(var2 + 1e-5) * g2_ref[0] + be2_ref[0]

    # carry to the next layer; HBM writeback only when the batch tile changes.
    out_ref[...] = y


def encoder_stack(x_flat, key_bias, params, *,
                  batch, seq, head, q_k_size, v_size, batch_tile=None):
    """x_flat: (B*S, E) f32, key_bias: (B, 1, S) f32 additive -> (B*S, E) f32."""
    rows, emb = x_flat.shape
    nblocks = params["wqkv"].shape[0]
    f_size = params["w1"].shape[-1]
    weights = [params[n] for n in _WEIGHT_NAMES]

    # Batch-parallel grid axis: default to 2 tiles (enough for v7x's 2 TCs)
    # while respecting the (8, *) sublane constraint on the flattened rows.
    if batch_tile is None:
        if batch % 2 == 0 and ((batch // 2) * seq) % 8 == 0:
            batch_tile = batch // 2
        else:
            batch_tile = batch
    assert batch % batch_tile == 0
    n_bt = batch // batch_tile
    rows_t = batch_tile * seq

    in_specs = [
        pl.BlockSpec((rows_t, emb), lambda b, l: (b, 0)),            # activation
        pl.BlockSpec((batch_tile, 1, seq), lambda b, l: (b, 0, 0)),  # key-pad bias
    ]
    for w in weights:
        # bind ndim via default arg (avoid late-binding of the loop variable)
        in_specs.append(
            pl.BlockSpec((1,) + w.shape[1:],
                         lambda b, l, nd=w.ndim - 1: (l,) + (0,) * nd))

    hd, hv = head * q_k_size, head * v_size
    flops_layer = (
        2 * rows * emb * (2 * hd + hv)                           # fused QKV
        + 2 * batch * head * seq * seq * (q_k_size + v_size)     # scores + PV
        + 2 * rows * hv * emb                                    # output projection
        + 4 * rows * emb * f_size                                # FFN (two matmuls)
    )
    weight_bytes = sum(int(w.size) * w.dtype.itemsize for w in weights)
    cost = pl.CostEstimate(
        flops=int(nblocks * flops_layer),
        transcendentals=int(nblocks * batch * head * seq * seq),
        bytes_accessed=int(2 * rows * emb * 4 + batch * seq * 4
                           + n_bt * weight_bytes),
    )

    # Explicit VMEM budget: double-buffered activation/bias/weight windows +
    # in-kernel temporaries, with 2x headroom (capped at v7x's 64 MiB).
    wt_block_bytes = sum(int(math.prod(w.shape[1:])) * w.dtype.itemsize
                         for w in weights)
    act_bytes = rows_t * emb * 4
    tmp_bytes = (rows_t * (2 * hd + hv) * 6                  # qkv f32 + bf16 copy
                 + 3 * head * batch_tile * seq * seq * 4     # s / p / bias
                 + 4 * rows_t * max(emb, f_size) * 4         # FFN / norm temps
                 + 2 * rows_t * hv * 4)                      # o / o_cat
    vmem_est = 4 * act_bytes + 2 * wt_block_bytes + 4 * batch_tile * seq * 4 + tmp_bytes
    vmem_limit = int(min(64 * 1024 * 1024, max(16 * 1024 * 1024, 2 * vmem_est)))

    kernel = functools.partial(
        _encoder_stack_kernel,
        batch_tile=batch_tile, seq=seq, head=head,
        q_k_size=q_k_size, v_size=v_size,
    )

    return pl.pallas_call(
        kernel,
        out_shape=jax.ShapeDtypeStruct((rows, emb), jnp.float32),
        grid_spec=pltpu.PrefetchScalarGridSpec(
            num_scalar_prefetch=0,
            grid=(n_bt, nblocks),
            in_specs=in_specs,
            out_specs=pl.BlockSpec((rows_t, emb), lambda b, l: (b, 0)),
        ),
        input_output_aliases={0: 0},            # x_flat HBM buffer reused as output
        compiler_params=pltpu.CompilerParams(
            dimension_semantics=("parallel", "arbitrary"),
            vmem_limit_bytes=vmem_limit,
        ),
        cost_estimate=cost,
    )(x_flat, key_bias, *weights)


# ---------------------------------------------------------------------------
# Parameter initialization (deterministic, synthetic) + embedding glue.
# ---------------------------------------------------------------------------
def sinusoidal_pos_encoding(seq_max_len, emb_size):
    pos = jnp.arange(seq_max_len, dtype=jnp.float32)[:, None]
    div = jnp.exp(
        -jnp.arange(0, emb_size, 2, dtype=jnp.float32)
        * (math.log(10000.0) / emb_size)
    )
    angles = pos * div                                  # (L, E/2)
    pe = jnp.zeros((seq_max_len, emb_size), jnp.float32)
    pe = pe.at[:, 0::2].set(jnp.sin(angles))
    pe = pe.at[:, 1::2].set(jnp.cos(angles))
    return pe


def init_encoder_params(key, vocab_size, emb_size, q_k_size, v_size, f_size,
                        head, nblocks):
    keys = jax.random.split(key, 1 + nblocks)
    emb_table = jax.random.normal(keys[0], (vocab_size, emb_size), jnp.float32) * 0.02

    def lin(k, fan_in, fan_out):
        kw, kb = jax.random.split(k)
        bound = 1.0 / math.sqrt(fan_in)
        w = jax.random.uniform(kw, (fan_in, fan_out), jnp.float32, -bound, bound)
        b = jax.random.uniform(kb, (1, fan_out), jnp.float32, -bound, bound)
        return w, b

    scale = 1.0 / math.sqrt(q_k_size)     # folded into Wq / bq (kernel skips it)
    per_layer = []
    for i in range(nblocks):
        ks = jax.random.split(keys[1 + i], 6)
        wq, bq = lin(ks[0], emb_size, head * q_k_size)
        wk, bk = lin(ks[1], emb_size, head * q_k_size)
        wv, bv = lin(ks[2], emb_size, head * v_size)
        wz, bz = lin(ks[3], head * v_size, emb_size)
        w1, b1 = lin(ks[4], emb_size, f_size)
        w2, b2 = lin(ks[5], f_size, emb_size)
        per_layer.append(dict(
            # fused QKV projection; bf16 MXU operands; scale folded into q path
            wqkv=jnp.concatenate([wq * scale, wk, wv], axis=1).astype(jnp.bfloat16),
            bqkv=jnp.concatenate([bq * scale, bk, bv], axis=1),       # f32
            wz=wz.astype(jnp.bfloat16),                               # (H*dv, E)
            bz=bz,
            g1=jnp.ones((1, emb_size), jnp.float32),
            be1=jnp.zeros((1, emb_size), jnp.float32),
            w1=w1.astype(jnp.bfloat16), b1=b1,
            w2=w2.astype(jnp.bfloat16), b2=b2,
            g2=jnp.ones((1, emb_size), jnp.float32),
            be2=jnp.zeros((1, emb_size), jnp.float32),
        ))
    stacked = {n: jnp.stack([blk[n] for blk in per_layer], axis=0)
               for n in _WEIGHT_NAMES}
    return emb_table, stacked


def encoder_forward(token_ids, emb_table, pos_enc, params,
                    *, head, q_k_size, v_size):
    B, S = token_ids.shape
    E = emb_table.shape[1]

    # embedding + positional encoding (glue; gather in plain JAX)
    x = jnp.take(emb_table, token_ids, axis=0) + pos_enc[None, :S, :]

    # additive key-pad bias (B, 1, S): -1e9 where the key position is PAD.
    key_bias = jnp.where(token_ids == PAD_IDX, -1e9, 0.0).astype(jnp.float32)
    key_bias = key_bias[:, None, :]

    out_flat = encoder_stack(
        x.reshape(B * S, E), key_bias, params,
        batch=B, seq=S, head=head, q_k_size=q_k_size, v_size=v_size,
    )
    return out_flat.reshape(B, S, E)


if __name__ == "__main__":
    vocab_size, emb_size = 100, 32
    q_k_size, v_size, f_size = 16, 16, 64
    head, nblocks = 2, 2
    seq_max_len = 64
    B, S = 2, 8

    key = jax.random.PRNGKey(0)
    k_tok, k_param = jax.random.split(key)

    token_ids = jax.random.randint(k_tok, (B, S), 0, vocab_size, dtype=jnp.int32)
    # force a couple of PAD tokens so the mask path is exercised
    token_ids = token_ids.at[0, -2:].set(PAD_IDX)

    emb_table, params = init_encoder_params(
        k_param, vocab_size, emb_size, q_k_size, v_size, f_size, head, nblocks
    )
    pos_enc = sinusoidal_pos_encoding(seq_max_len, emb_size)

    fwd = jax.jit(functools.partial(
        encoder_forward, head=head, q_k_size=q_k_size, v_size=v_size))
    out = jax.block_until_ready(fwd(token_ids, emb_table, pos_enc, params))
    assert out.shape == (B, S, emb_size) and out.dtype == jnp.float32
    assert bool(jnp.all(jnp.isfinite(out)))
    print("KERNEL_OK")
</pallas_src>

<mosaic_0001>
module attributes {stable_mosaic.version = 11 : i64} {
  func.func @_encoder_stack_kernel(%arg0: i32, %arg1: i32, %arg2: memref<8x32xf32, #tpu.memory_space<vmem>>, %arg3: memref<1x1x8xf32, #tpu.memory_space<vmem>>, %arg4: memref<1x32x96xbf16, #tpu.memory_space<vmem>>, %arg5: memref<1x1x96xf32, #tpu.memory_space<vmem>>, %arg6: memref<1x32x32xbf16, #tpu.memory_space<vmem>>, %arg7: memref<1x1x32xf32, #tpu.memory_space<vmem>>, %arg8: memref<1x1x32xf32, #tpu.memory_space<vmem>>, %arg9: memref<1x1x32xf32, #tpu.memory_space<vmem>>, %arg10: memref<1x32x64xbf16, #tpu.memory_space<vmem>>, %arg11: memref<1x1x64xf32, #tpu.memory_space<vmem>>, %arg12: memref<1x64x32xbf16, #tpu.memory_space<vmem>>, %arg13: memref<1x1x32xf32, #tpu.memory_space<vmem>>, %arg14: memref<1x1x32xf32, #tpu.memory_space<vmem>>, %arg15: memref<1x1x32xf32, #tpu.memory_space<vmem>>, %arg16: memref<8x32xf32, #tpu.memory_space<vmem>>) attributes {dimension_semantics = [#tpu.dimension_semantics<parallel>, #tpu.dimension_semantics<arbitrary>], iteration_bounds = array<i64: 2, 2>, scalar_prefetch = 0 : i64, scratch_operands = 0 : i64, tpu.core_type = #tpu.core_type<tc>, window_params = [{transform_indices = @transform_0, window_bounds = array<i64: 8, 32>}, {transform_indices = @transform_1, window_bounds = array<i64: 1, 1, 8>}, {transform_indices = @transform_2, window_bounds = array<i64: 1, 32, 96>}, {transform_indices = @transform_3, window_bounds = array<i64: 1, 1, 96>}, {transform_indices = @transform_4, window_bounds = array<i64: 1, 32, 32>}, {transform_indices = @transform_5, window_bounds = array<i64: 1, 1, 32>}, {transform_indices = @transform_6, window_bounds = array<i64: 1, 1, 32>}, {transform_indices = @transform_7, window_bounds = array<i64: 1, 1, 32>}, {transform_indices = @transform_8, window_bounds = array<i64: 1, 32, 64>}, {transform_indices = @transform_9, window_bounds = array<i64: 1, 1, 64>}, {transform_indices = @transform_10, window_bounds = array<i64: 1, 64, 32>}, {transform_indices = @transform_11, window_bounds = array<i64: 1, 1, 32>}, {transform_indices = @transform_12, window_bounds = array<i64: 1, 1, 32>}, {transform_indices = @transform_13, window_bounds = array<i64: 1, 1, 32>}, {transform_indices = @transform_14, window_bounds = array<i64: 8, 32>}]} {
    %c0_i32 = arith.constant 0 : i32
    %0 = arith.cmpi eq, %arg1, %c0_i32 : i32
    %1 = arith.extui %0 : i1 to i32
    %c0_i32_0 = arith.constant 0 : i32
    %2 = arith.cmpi ne, %1, %c0_i32_0 : i32
    scf.if %2 {
      %c0_61 = arith.constant 0 : index
      %c0_62 = arith.constant 0 : index
      %125 = vector.load %arg2[%c0_61, %c0_62] : memref<8x32xf32, #tpu.memory_space<vmem>>, vector<8x32xf32>
      %c0_63 = arith.constant 0 : index
      %c0_64 = arith.constant 0 : index
      %126 = vector.load %arg16[%c0_63, %c0_64] : memref<8x32xf32, #tpu.memory_space<vmem>>, vector<8x32xf32>
      tpu.vector_store %arg16[%c0_63, %c0_64], %125 {strides = array<i32>} : memref<8x32xf32, #tpu.memory_space<vmem>>, vector<8x32xf32>,
    } else {
    }
    %c0 = arith.constant 0 : index
    %c0_1 = arith.constant 0 : index
    %3 = vector.load %arg16[%c0, %c0_1] : memref<8x32xf32, #tpu.memory_space<vmem>>, vector<8x32xf32>
    %4 = arith.truncf %3 : vector<8x32xf32> to vector<8x32xbf16>
    %c0_2 = arith.constant 0 : index
    %c0_3 = arith.constant 0 : index
    %c0_4 = arith.constant 0 : index
    %5 = vector.load %arg4[%c0_2, %c0_3, %c0_4] : memref<1x32x96xbf16, #tpu.memory_space<vmem>>, vector<1x32x96xbf16>
    %6 = vector.shape_cast %5 : vector<1x32x96xbf16> to vector<32x96xbf16>
    %cst = arith.constant dense<0.000000e+00> : vector<8x96xf32>
    %7 = tpu.matmul %4, %6, %cst {dimension_numbers = #tpu.dot_dimension_numbers<[1], [0], [0], [1], [0, 0, 1, 1], [], []>} : vector<8x32xbf16>, vector<32x96xbf16>, vector<8x96xf32> -> vector<8x96xf32>
    %c0_5 = arith.constant 0 : index
    %c0_6 = arith.constant 0 : index
    %c0_7 = arith.constant 0 : index
    %8 = vector.load %arg5[%c0_5, %c0_6, %c0_7] : memref<1x1x96xf32, #tpu.memory_space<vmem>>, vector<1x1x96xf32>
    %9 = vector.shape_cast %8 : vector<1x1x96xf32> to vector<1x96xf32>
    %10 = vector.broadcast %9 : vector<1x96xf32> to vector<8x96xf32>
    %11 = arith.addf %7, %10 : vector<8x96xf32>
    %12 = vector.shape_cast %11 : vector<8x96xf32> to vector<1x8x96xf32>
    %13 = arith.truncf %12 : vector<1x8x96xf32> to vector<1x8x96xbf16>
    %14 = vector.extract_strided_slice %13 {offsets = [0, 0, 0], sizes = [1, 8, 16], strides = [1, 1, 1]} : vector<1x8x96xbf16> to vector<1x8x16xbf16>
    %15 = vector.extract_strided_slice %13 {offsets = [0, 0, 16], sizes = [1, 8, 16], strides = [1, 1, 1]} : vector<1x8x96xbf16> to vector<1x8x16xbf16>
    %16 = tpu.concatenate %14, %15 in 0 : vector<1x8x16xbf16>, vector<1x8x16xbf16> -> vector<2x8x16xbf16>
    %17 = vector.extract_strided_slice %13 {offsets = [0, 0, 32], sizes = [1, 8, 16], strides = [1, 1, 1]} : vector<1x8x96xbf16> to vector<1x8x16xbf16>
    %18 = vector.extract_strided_slice %13 {offsets = [0, 0, 48], sizes = [1, 8, 16], strides = [1, 1, 1]} : vector<1x8x96xbf16> to vector<1x8x16xbf16>
    %19 = tpu.concatenate %17, %18 in 0 : vector<1x8x16xbf16>, vector<1x8x16xbf16> -> vector<2x8x16xbf16>
    %20 = vector.extract_strided_slice %13 {offsets = [0, 0, 64], sizes = [1, 8, 16], strides = [1, 1, 1]} : vector<1x8x96xbf16> to vector<1x8x16xbf16>
    %21 = vector.extract_strided_slice %13 {offsets = [0, 0, 80], sizes = [1, 8, 16], strides = [1, 1, 1]} : vector<1x8x96xbf16> to vector<1x8x16xbf16>
    %22 = tpu.concatenate %20, %21 in 0 : vector<1x8x16xbf16>, vector<1x8x16xbf16> -> vector<2x8x16xbf16>
    %c0_8 = arith.constant 0 : index
    %c0_9 = arith.constant 0 : index
    %c0_10 = arith.constant 0 : index
    %23 = vector.load %arg3[%c0_8, %c0_9, %c0_10] : memref<1x1x8xf32, #tpu.memory_space<vmem>>, vector<1x1x8xf32>
    %24 = tpu.concatenate %23, %23 in 0 : vector<1x1x8xf32>, vector<1x1x8xf32> -> vector<2x1x8xf32>
    "tpu.trace_start"() <{level = 10 : i32, message = "bqd,bkd->bqk"}> : () -> ()
    %cst_11 = arith.constant dense<0.000000e+00> : vector<2x8x8xf32>
    %25 = tpu.matmul %16, %19, %cst_11 {dimension_numbers = #tpu.dot_dimension_numbers<[2], [2], [1], [1], [0, 0, 0, 1, 1, 1], [0], [0]>} : vector<2x8x16xbf16>, vector<2x8x16xbf16>, vector<2x8x8xf32> -> vector<2x8x8xf32>
    "tpu.trace_stop"() : () -> ()
    %26 = vector.broadcast %24 : vector<2x1x8xf32> to vector<2x8x8xf32>
    %27 = arith.addf %25, %26 : vector<2x8x8xf32>
    %cst_12 = arith.constant dense<0xFF800000> : vector<2x8xf32>
    %28 = vector.multi_reduction <maximumf>, %27, %cst_12 [2] : vector<2x8x8xf32> to vector<2x8xf32>
    %29 = vector.shape_cast %28 : vector<2x8xf32> to vector<2x8x1xf32>
    %30 = vector.broadcast %29 : vector<2x8x1xf32> to vector<2x8x8xf32>
    %31 = arith.subf %27, %30 : vector<2x8x8xf32>
    %32 = math.exp %31 : vector<2x8x8xf32>
    %cst_13 = arith.constant dense<0.000000e+00> : vector<2x8xf32>
    %33 = vector.multi_reduction <add>, %32, %cst_13 [2] : vector<2x8x8xf32> to vector<2x8xf32>
    %34 = vector.shape_cast %33 : vector<2x8xf32> to vector<2x8x1xf32>
    %35 = tpu.reciprocal %34 {approx = true} : vector<2x8x1xf32> -> vector<2x8x1xf32>
    %36 = vector.broadcast %35 : vector<2x8x1xf32> to vector<2x8x8xf32>
    %37 = arith.mulf %32, %36 : vector<2x8x8xf32>
    %38 = arith.truncf %37 : vector<2x8x8xf32> to vector<2x8x8xbf16>
    "tpu.trace_start"() <{level = 10 : i32, message = "bqk,bkd->bqd"}> : () -> ()
    %cst_14 = arith.constant dense<0.000000e+00> : vector<2x8x16xf32>
    %39 = tpu.matmul %38, %22, %cst_14 {dimension_numbers = #tpu.dot_dimension_numbers<[2], [1], [1], [2], [0, 0, 0, 1, 1, 2], [0], [0]>} : vector<2x8x8xbf16>, vector<2x8x16xbf16>, vector<2x8x16xf32> -> vector<2x8x16xf32>
    "tpu.trace_stop"() : () -> ()
    %40 = vector.extract_strided_slice %39 {offsets = [0, 0, 0], sizes = [1, 8, 16], strides = [1, 1, 1]} : vector<2x8x16xf32> to vector<1x8x16xf32>
    %41 = vector.extract_strided_slice %39 {offsets = [1, 0, 0], sizes = [1, 8, 16], strides = [1, 1, 1]} : vector<2x8x16xf32> to vector<1x8x16xf32>
    %42 = tpu.concatenate %40, %41 in 2 : vector<1x8x16xf32>, vector<1x8x16xf32> -> vector<1x8x32xf32>
    %43 = vector.shape_cast %42 : vector<1x8x32xf32> to vector<8x32xf32>
    %44 = arith.truncf %43 : vector<8x32xf32> to vector<8x32xbf16>
    %c0_15 = arith.constant 0 : index
    %c0_16 = arith.constant 0 : index
    %c0_17 = arith.constant 0 : index
    %45 = vector.load %arg6[%c0_15, %c0_16, %c0_17] : memref<1x32x32xbf16, #tpu.memory_space<vmem>>, vector<1x32x32xbf16>
    %46 = vector.shape_cast %45 : vector<1x32x32xbf16> to vector<32x32xbf16>
    %cst_18 = arith.constant dense<0.000000e+00> : vector<8x32xf32>
    %47 = tpu.matmul %44, %46, %cst_18 {dimension_numbers = #tpu.dot_dimension_numbers<[1], [0], [0], [1], [0, 0, 1, 1], [], []>} : vector<8x32xbf16>, vector<32x32xbf16>, vector<8x32xf32> -> vector<8x32xf32>
    %c0_19 = arith.constant 0 : index
    %c0_20 = arith.constant 0 : index
    %c0_21 = arith.constant 0 : index
    %48 = vector.load %arg7[%c0_19, %c0_20, %c0_21] : memref<1x1x32xf32, #tpu.memory_space<vmem>>, vector<1x1x32xf32>
    %49 = vector.shape_cast %48 : vector<1x1x32xf32> to vector<1x32xf32>
    %50 = vector.broadcast %49 : vector<1x32xf32> to vector<8x32xf32>
    %51 = arith.addf %47, %50 : vector<8x32xf32>
    %52 = arith.addf %51, %3 : vector<8x32xf32>
    %cst_22 = arith.constant dense<0.000000e+00> : vector<8xf32>
    %53 = vector.multi_reduction <add>, %52, %cst_22 [1] : vector<8x32xf32> to vector<8xf32>
    %54 = vector.shape_cast %53 : vector<8xf32> to vector<8x1xf32>
    %cst_23 = arith.constant 3.200000e+01 : f32
    %55 = vector.broadcast %cst_23 : f32 to vector<8x1xf32>
    %56 = arith.divf %54, %55 : vector<8x1xf32>
    %57 = arith.mulf %52, %52 : vector<8x32xf32>
    %cst_24 = arith.constant dense<0.000000e+00> : vector<8xf32>
    %58 = vector.multi_reduction <add>, %57, %cst_24 [1] : vector<8x32xf32> to vector<8xf32>
    %59 = vector.shape_cast %58 : vector<8xf32> to vector<8x1xf32>
    %cst_25 = arith.constant 3.200000e+01 : f32
    %60 = vector.broadcast %cst_25 : f32 to vector<8x1xf32>
    %61 = arith.divf %59, %60 : vector<8x1xf32>
    %62 = arith.mulf %56, %56 : vector<8x1xf32>
    %63 = arith.subf %61, %62 : vector<8x1xf32>
    %64 = vector.broadcast %56 : vector<8x1xf32> to vector<8x32xf32>
    %65 = arith.subf %52, %64 : vector<8x32xf32>
    %cst_26 = arith.constant 9.99999974E-6 : f32
    %66 = vector.broadcast %cst_26 : f32 to vector<8x1xf32>
    %67 = arith.addf %63, %66 : vector<8x1xf32>
    %68 = math.rsqrt %67 : vector<8x1xf32>
    %69 = vector.broadcast %68 : vector<8x1xf32> to vector<8x32xf32>
    %70 = arith.mulf %65, %69 : vector<8x32xf32>
    %c0_27 = arith.constant 0 : index
    %c0_28 = arith.constant 0 : index
    %c0_29 = arith.constant 0 : index
    %71 = vector.load %arg8[%c0_27, %c0_28, %c0_29] : memref<1x1x32xf32, #tpu.memory_space<vmem>>, vector<1x1x32xf32>
    %72 = vector.shape_cast %71 : vector<1x1x32xf32> to vector<1x32xf32>
    %73 = vector.broadcast %72 : vector<1x32xf32> to vector<8x32xf32>
    %74 = arith.mulf %70, %73 : vector<8x32xf32>
    %c0_30 = arith.constant 0 : index
    %c0_31 = arith.constant 0 : index
    %c0_32 = arith.constant 0 : index
    %75 = vector.load %arg9[%c0_30, %c0_31, %c0_32] : memref<1x1x32xf32, #tpu.memory_space<vmem>>, vector<1x1x32xf32>
    %76 = vector.shape_cast %75 : vector<1x1x32xf32> to vector<1x32xf32>
    %77 = vector.broadcast %76 : vector<1x32xf32> to vector<8x32xf32>
    %78 = arith.addf %74, %77 : vector<8x32xf32>
    %79 = arith.truncf %78 : vector<8x32xf32> to vector<8x32xbf16>
    %c0_33 = arith.constant 0 : index
    %c0_34 = arith.constant 0 : index
    %c0_35 = arith.constant 0 : index
    %80 = vector.load %arg10[%c0_33, %c0_34, %c0_35] : memref<1x32x64xbf16, #tpu.memory_space<vmem>>, vector<1x32x64xbf16>
    %81 = vector.shape_cast %80 : vector<1x32x64xbf16> to vector<32x64xbf16>
    %cst_36 = arith.constant dense<0.000000e+00> : vector<8x64xf32>
    %82 = tpu.matmul %79, %81, %cst_36 {dimension_numbers = #tpu.dot_dimension_numbers<[1], [0], [0], [1], [0, 0, 1, 1], [], []>} : vector<8x32xbf16>, vector<32x64xbf16>, vector<8x64xf32> -> vector<8x64xf32>
    %c0_37 = arith.constant 0 : index
    %c0_38 = arith.constant 0 : index
    %c0_39 = arith.constant 0 : index
    %83 = vector.load %arg11[%c0_37, %c0_38, %c0_39] : memref<1x1x64xf32, #tpu.memory_space<vmem>>, vector<1x1x64xf32>
    %84 = vector.shape_cast %83 : vector<1x1x64xf32> to vector<1x64xf32>
    %85 = vector.broadcast %84 : vector<1x64xf32> to vector<8x64xf32>
    %86 = arith.addf %82, %85 : vector<8x64xf32>
    %cst_40 = arith.constant 0.000000e+00 : f32
    %87 = vector.broadcast %cst_40 : f32 to vector<8x64xf32>
    %88 = arith.maximumf %86, %87 : vector<8x64xf32>
    %89 = arith.truncf %88 : vector<8x64xf32> to vector<8x64xbf16>
    %c0_41 = arith.constant 0 : index
    %c0_42 = arith.constant 0 : index
    %c0_43 = arith.constant 0 : index
    %90 = vector.load %arg12[%c0_41, %c0_42, %c0_43] : memref<1x64x32xbf16, #tpu.memory_space<vmem>>, vector<1x64x32xbf16>
    %91 = vector.shape_cast %90 : vector<1x64x32xbf16> to vector<64x32xbf16>
    %cst_44 = arith.constant dense<0.000000e+00> : vector<8x32xf32>
    %92 = tpu.matmul %89, %91, %cst_44 {dimension_numbers = #tpu.dot_dimension_numbers<[1], [0], [0], [1], [0, 0, 1, 1], [], []>} : vector<8x64xbf16>, vector<64x32xbf16>, vector<8x32xf32> -> vector<8x32xf32>
    %c0_45 = arith.constant 0 : index
    %c0_46 = arith.constant 0 : index
    %c0_47 = arith.constant 0 : index
    %93 = vector.load %arg13[%c0_45, %c0_46, %c0_47] : memref<1x1x32xf32, #tpu.memory_space<vmem>>, vector<1x1x32xf32>
    %94 = vector.shape_cast %93 : vector<1x1x32xf32> to vector<1x32xf32>
    %95 = vector.broadcast %94 : vector<1x32xf32> to vector<8x32xf32>
    %96 = arith.addf %92, %95 : vector<8x32xf32>
    %97 = arith.addf %96, %78 : vector<8x32xf32>
    %cst_48 = arith.constant dense<0.000000e+00> : vector<8xf32>
    %98 = vector.multi_reduction <add>, %97, %cst_48 [1] : vector<8x32xf32> to vector<8xf32>
    %99 = vector.shape_cast %98 : vector<8xf32> to vector<8x1xf32>
    %cst_49 = arith.constant 3.200000e+01 : f32
    %100 = vector.broadcast %cst_49 : f32 to vector<8x1xf32>
    %101 = arith.divf %99, %100 : vector<8x1xf32>
    %102 = arith.mulf %97, %97 : vector<8x32xf32>
    %cst_50 = arith.constant dense<0.000000e+00> : vector<8xf32>
    %103 = vector.multi_reduction <add>, %102, %cst_50 [1] : vector<8x32xf32> to vector<8xf32>
    %104 = vector.shape_cast %103 : vector<8xf32> to vector<8x1xf32>
    %cst_51 = arith.constant 3.200000e+01 : f32
    %105 = vector.broadcast %cst_51 : f32 to vector<8x1xf32>
    %106 = arith.divf %104, %105 : vector<8x1xf32>
    %107 = arith.mulf %101, %101 : vector<8x1xf32>
    %108 = arith.subf %106, %107 : vector<8x1xf32>
    %109 = vector.broadcast %101 : vector<8x1xf32> to vector<8x32xf32>
    %110 = arith.subf %97, %109 : vector<8x32xf32>
    %cst_52 = arith.constant 9.99999974E-6 : f32
    %111 = vector.broadcast %cst_52 : f32 to vector<8x1xf32>
    %112 = arith.addf %108, %111 : vector<8x1xf32>
    %113 = math.rsqrt %112 : vector<8x1xf32>
    %114 = vector.broadcast %113 : vector<8x1xf32> to vector<8x32xf32>
    %115 = arith.mulf %110, %114 : vector<8x32xf32>
    %c0_53 = arith.constant 0 : index
    %c0_54 = arith.constant 0 : index
    %c0_55 = arith.constant 0 : index
    %116 = vector.load %arg14[%c0_53, %c0_54, %c0_55] : memref<1x1x32xf32, #tpu.memory_space<vmem>>, vector<1x1x32xf32>
    %117 = vector.shape_cast %116 : vector<1x1x32xf32> to vector<1x32xf32>
    %118 = vector.broadcast %117 : vector<1x32xf32> to vector<8x32xf32>
    %119 = arith.mulf %115, %118 : vector<8x32xf32>
    %c0_56 = arith.constant 0 : index
    %c0_57 = arith.constant 0 : index
    %c0_58 = arith.constant 0 : index
    %120 = vector.load %arg15[%c0_56, %c0_57, %c0_58] : memref<1x1x32xf32, #tpu.memory_space<vmem>>, vector<1x1x32xf32>
    %121 = vector.shape_cast %120 : vector<1x1x32xf32> to vector<1x32xf32>
    %122 = vector.broadcast %121 : vector<1x32xf32> to vector<8x32xf32>
    %123 = arith.addf %119, %122 : vector<8x32xf32>
    %c0_59 = arith.constant 0 : index
    %c0_60 = arith.constant 0 : index
    %124 = vector.load %arg16[%c0_59, %c0_60] : memref<8x32xf32, #tpu.memory_space<vmem>>, vector<8x32xf32>
    tpu.vector_store %arg16[%c0_59, %c0_60], %123 {strides = array<i32>} : memref<8x32xf32, #tpu.memory_space<vmem>>, vector<8x32xf32>,
    return
  }
  func.func @transform_0(%arg0: i32, %arg1: i32) -> (i32, i32) {
    %c0_i32 = arith.constant 0 : i32
    %c0_i32_0 = arith.constant 0 : i32
    return %arg0, %c0_i32 : i32, i32
  }
  func.func @transform_1(%arg0: i32, %arg1: i32) -> (i32, i32, i32) {
    %c0_i32 = arith.constant 0 : i32
    %c0_i32_0 = arith.constant 0 : i32
    %c0_i32_1 = arith.constant 0 : i32
    return %arg0, %c0_i32, %c0_i32_0 : i32, i32, i32
  }
  func.func @transform_2(%arg0: i32, %arg1: i32) -> (i32, i32, i32) {
    %c0_i32 = arith.constant 0 : i32
    %c0_i32_0 = arith.constant 0 : i32
    %c0_i32_1 = arith.constant 0 : i32
    return %arg1, %c0_i32, %c0_i32_0 : i32, i32, i32
  }
  func.func @transform_3(%arg0: i32, %arg1: i32) -> (i32, i32, i32) {
    %c0_i32 = arith.constant 0 : i32
    %c0_i32_0 = arith.constant 0 : i32
    %c0_i32_1 = arith.constant 0 : i32
    return %arg1, %c0_i32, %c0_i32_0 : i32, i32, i32
  }
  func.func @transform_4(%arg0: i32, %arg1: i32) -> (i32, i32, i32) {
    %c0_i32 = arith.constant 0 : i32
    %c0_i32_0 = arith.constant 0 : i32
    %c0_i32_1 = arith.constant 0 : i32
    return %arg1, %c0_i32, %c0_i32_0 : i32, i32, i32
  }
  func.func @transform_5(%arg0: i32, %arg1: i32) -> (i32, i32, i32) {
    %c0_i32 = arith.constant 0 : i32
    %c0_i32_0 = arith.constant 0 : i32
    %c0_i32_1 = arith.constant 0 : i32
    return %arg1, %c0_i32, %c0_i32_0 : i32, i32, i32
  }
  func.func @transform_6(%arg0: i32, %arg1: i32) -> (i32, i32, i32) {
    %c0_i32 = arith.constant 0 : i32
    %c0_i32_0 = arith.constant 0 : i32
    %c0_i32_1 = arith.constant 0 : i32
    return %arg1, %c0_i32, %c0_i32_0 : i32, i32, i32
  }
  func.func @transform_7(%arg0: i32, %arg1: i32) -> (i32, i32, i32) {
    %c0_i32 = arith.constant 0 : i32
    %c0_i32_0 = arith.constant 0 : i32
    %c0_i32_1 = arith.constant 0 : i32
    return %arg1, %c0_i32, %c0_i32_0 : i32, i32, i32
  }
  func.func @transform_8(%arg0: i32, %arg1: i32) -> (i32, i32, i32) {
    %c0_i32 = arith.constant 0 : i32
    %c0_i32_0 = arith.constant 0 : i32
    %c0_i32_1 = arith.constant 0 : i32
    return %arg1, %c0_i32, %c0_i32_0 : i32, i32, i32
  }
  func.func @transform_9(%arg0: i32, %arg1: i32) -> (i32, i32, i32) {
    %c0_i32 = arith.constant 0 : i32
    %c0_i32_0 = arith.constant 0 : i32
    %c0_i32_1 = arith.constant 0 : i32
    return %arg1, %c0_i32, %c0_i32_0 : i32, i32, i32
  }
  func.func @transform_10(%arg0: i32, %arg1: i32) -> (i32, i32, i32) {
    %c0_i32 = arith.constant 0 : i32
    %c0_i32_0 = arith.constant 0 : i32
    %c0_i32_1 = arith.constant 0 : i32
    return %arg1, %c0_i32, %c0_i32_0 : i32, i32, i32
  }
  func.func @transform_11(%arg0: i32, %arg1: i32) -> (i32, i32, i32) {
    %c0_i32 = arith.constant 0 : i32
    %c0_i32_0 = arith.constant 0 : i32
    %c0_i32_1 = arith.constant 0 : i32
    return %arg1, %c0_i32, %c0_i32_0 : i32, i32, i32
  }
  func.func @transform_12(%arg0: i32, %arg1: i32) -> (i32, i32, i32) {
    %c0_i32 = arith.constant 0 : i32
    %c0_i32_0 = arith.constant 0 : i32
    %c0_i32_1 = arith.constant 0 : i32
    return %arg1, %c0_i32, %c0_i32_0 : i32, i32, i32
  }
  func.func @transform_13(%arg0: i32, %arg1: i32) -> (i32, i32, i32) {
    %c0_i32 = arith.constant 0 : i32
    %c0_i32_0 = arith.constant 0 : i32
    %c0_i32_1 = arith.constant 0 : i32
    return %arg1, %c0_i32, %c0_i32_0 : i32, i32, i32
  }
  func.func @transform_14(%arg0: i32, %arg1: i32) -> (i32, i32) {
    %c0_i32 = arith.constant 0 : i32
    %c0_i32_0 = arith.constant 0 : i32
    return %arg0, %c0_i32 : i32, i32
  }
}

</mosaic_0001>

<llo_original>
// kernel: encoder_forward.1
$region0: #{encoder_forward.1}
  #allocation0 [shape = 'u32[]', space=smem, size = 0x4, offset = 0x4, fixed_abs, tag = 'smem constant byte address 0x4 - core index']
  #allocation1 [shape = 'u32[144,128]{1,0:T(1,128)}', space=vmem, size = 0x12000, scoped, tag = 'internal scratch']
  %s0 = inlined_call_operand.vmem [shape: f32[16,32], index: 0, kind: input, shape index: {}, may-alias: {0,14}]
  %s1 = inlined_call_operand.vmem [shape: f32[2,1,8], index: 1, kind: input, shape index: {}]
  %s2 = inlined_call_operand.vmem [shape: bf16[2,32,96], index: 2, kind: input, shape index: {}]
  %s3 = inlined_call_operand.vmem [shape: f32[2,1,96], index: 3, kind: input, shape index: {}]
  %s4 = inlined_call_operand.vmem [shape: bf16[2,32,32], index: 4, kind: input, shape index: {}]
  %s5 = inlined_call_operand.vmem [shape: f32[2,1,32], index: 5, kind: input, shape index: {}]
  %s6 = inlined_call_operand.vmem [shape: f32[2,1,32], index: 6, kind: input, shape index: {}]
  %s7 = inlined_call_operand.vmem [shape: f32[2,1,32], index: 7, kind: input, shape index: {}]
  %s8 = inlined_call_operand.vmem [shape: bf16[2,32,64], index: 8, kind: input, shape index: {}]
  %s9 = inlined_call_operand.vmem [shape: f32[2,1,64], index: 9, kind: input, shape index: {}]
  %s10 = inlined_call_operand.vmem [shape: bf16[2,64,32], index: 10, kind: input, shape index: {}]
  %s11 = inlined_call_operand.vmem [shape: f32[2,1,32], index: 11, kind: input, shape index: {}]
  %s12 = inlined_call_operand.vmem [shape: f32[2,1,32], index: 12, kind: input, shape index: {}]
  %s13 = inlined_call_operand.vmem [shape: f32[2,1,32], index: 13, kind: input, shape index: {}]
  %s14 = inlined_call_operand.vmem [shape: f32[16,32], index: 14, kind: output, shape index: {}, may-alias: {0,14}]
  %s15 = sld [smem:[#allocation0]]
  $region93: #{encoder_forward.1} parent=0
    _
  %s17 = ssub.s32 1, %s15
  %s18 = scalar_select 0, %s17, %s15
  loop: start=0, step=1, limit=6
  $region2: #{encoder_forward.1} parent=0 // loop_pre_header
    _
  $region3: #{encoder_forward.1} parent=0 // loop_header
    %s20 = sphi 0, %s24
    %p21 = scmp.ge.s32.totalorder %s20, 6
    %s27 = sphi 0, %s39
    %s28 = sphi 0, %s35
    %s29 = sphi 0, %s27
    %s30 = sphi 0, %s28
    %s31 = sphi 0, %s29
    %s32 = sphi 0, %s30
    %s42 = sphi 0, %s44
    %s45 = sphi 0, %s42
    %s46 = sphi 0, %s45
    %s62 = sphi 0, %s46
    %s68 = sphi 0, %s70
    %s71 = sphi 0, %s68
    %s72 = sphi 0, %s71
    %s88 = sphi 0, %s72
    %s94 = sphi 0, %s96
    %s97 = sphi 0, %s94
    %s98 = sphi 0, %s97
    %s114 = sphi 0, %s98
    %s120 = sphi 0, %s122
    %s123 = sphi 0, %s120
    %s124 = sphi 0, %s123
    %s140 = sphi 0, %s124
    %s146 = sphi 0, %s148
    %s149 = sphi 0, %s146
    %s150 = sphi 0, %s149
    %s166 = sphi 0, %s150
    %s172 = sphi 0, %s174
    %s175 = sphi 0, %s172
    %s176 = sphi 0, %s175
    %s192 = sphi 0, %s176
    %s198 = sphi 0, %s200
    %s201 = sphi 0, %s198
    %s202 = sphi 0, %s201
    %s218 = sphi 0, %s202
    %s224 = sphi 0, %s226
    %s227 = sphi 0, %s224
    %s228 = sphi 0, %s227
    %s244 = sphi 0, %s228
    %s250 = sphi 0, %s252
    %s253 = sphi 0, %s250
    %s254 = sphi 0, %s253
    %s270 = sphi 0, %s254
    %s276 = sphi 0, %s278
    %s279 = sphi 0, %s276
    %s280 = sphi 0, %s279
    %s296 = sphi 0, %s280
    %s302 = sphi 0, %s304
    %s305 = sphi 0, %s302
    %s306 = sphi 0, %s305
    %s322 = sphi 0, %s306
    %s328 = sphi 0, %s330
    %s331 = sphi 0, %s328
    %s332 = sphi 0, %s331
    %s348 = sphi 0, %s332
    %s354 = sphi 0, %s356
    %s357 = sphi 0, %s354
    %s358 = sphi 0, %s357
    %s374 = sphi 0, %s358
    %s380 = sphi 0, %s382
    %s383 = sphi 0, %s380
    %s384 = sphi 0, %s383
    %s400 = sphi 0, %s384
    %s406 = sphi 0, %s408
    %s409 = sphi 0, %s406
    %s410 = sphi 0, %s409
    %s426 = sphi 0, %s410
  $region4: #{encoder_forward.1} parent=0 // loop_header_branch
    %23 = sbr.rel (%p21) target = $region8
  $region5: #{encoder_forward.1} parent=0 // loop_body
    %s25 = ssub.s32 %s20, 1
    %s26 = ssub.s32 %s20, 2
    %s33 = sadd.s32 1, %s28
    %p34 = scmp.ge.s32.totalorder %s33, 2
    %s35 = scalar_select %p34, 0, %s33
    %s36 = sadd.s32 1, %s27
    %s37 = scalar_select %p34, %s36, %s27
    %p38 = scmp.ge.s32.totalorder %s37, 2
    %s39 = scalar_select %p38, 0, %s37
    %s40 = ssub.s32 %s27, %s39
    %p41 = scmp.eq.s32.totalorder %s40, 0
    %s43 = sadd.s32 %s42, 1
    %s44 = scalar_select %p41, %s42, %s43
    %p47 = pneg %p41
    %p48 = scmp.eq.s32.totalorder %s20, 3
    %p49 = por %p47, %p48
    %p50 = scmp.ne.s32.totalorder %s42, %s45
    %p51 = scmp.eq.s32.totalorder %s20, 0
    %p52 = por %p50, %p51
    %p53 = scmp.ne.s32.totalorder %s42, %s45
    %p54 = scmp.eq.s32.totalorder %s25, 3
    %p55 = por %p53, %p54
    %p56 = scmp.ne.s32.totalorder %s45, %s46
    %p57 = scmp.eq.s32.totalorder %s25, 0
    %p58 = por %p56, %p57
    %p59 = scmp.ne.s32.totalorder %s45, %s46
    %p60 = scmp.eq.s32.totalorder %s26, 3
    %p61 = por %p59, %p60
    %p63 = scmp.ne.s32.totalorder %s46, %s62
    %p64 = scmp.eq.s32.totalorder %s26, 0
    %p65 = por %p63, %p64
    %s66 = ssub.s32 %s27, %s39
    %p67 = scmp.eq.s32.totalorder %s66, 0
    %s69 = sadd.s32 %s68, 1
    %s70 = scalar_select %p67, %s68, %s69
    %p73 = pneg %p67
    %p74 = scmp.eq.s32.totalorder %s20, 3
    %p75 = por %p73, %p74
    %p76 = scmp.ne.s32.totalorder %s68, %s71
    %p77 = scmp.eq.s32.totalorder %s20, 0
    %p78 = por %p76, %p77
    %p79 = scmp.ne.s32.totalorder %s68, %s71
    %p80 = scmp.eq.s32.totalorder %s25, 3
    %p81 = por %p79, %p80
    %p82 = scmp.ne.s32.totalorder %s71, %s72
    %p83 = scmp.eq.s32.totalorder %s25, 0
    %p84 = por %p82, %p83
    %p85 = scmp.ne.s32.totalorder %s71, %s72
    %p86 = scmp.eq.s32.totalorder %s26, 3
    %p87 = por %p85, %p86
    %p89 = scmp.ne.s32.totalorder %s72, %s88
    %p90 = scmp.eq.s32.totalorder %s26, 0
    %p91 = por %p89, %p90
    %s92 = ssub.s32 %s28, %s35
    %p93 = scmp.eq.s32.totalorder %s92, 0
    %s95 = sadd.s32 %s94, 1
    %s96 = scalar_select %p93, %s94, %s95
    %p99 = pneg %p93
    %p100 = scmp.eq.s32.totalorder %s20, 3
    %p101 = por %p99, %p100
    %p102 = scmp.ne.s32.totalorder %s94, %s97
    %p103 = scmp.eq.s32.totalorder %s20, 0
    %p104 = por %p102, %p103
    %p105 = scmp.ne.s32.totalorder %s94, %s97
    %p106 = scmp.eq.s32.totalorder %s25, 3
    %p107 = por %p105, %p106
    %p108 = scmp.ne.s32.totalorder %s97, %s98
    %p109 = scmp.eq.s32.totalorder %s25, 0
    %p110 = por %p108, %p109
    %p111 = scmp.ne.s32.totalorder %s97, %s98
    %p112 = scmp.eq.s32.totalorder %s26, 3
    %p113 = por %p111, %p112
    %p115 = scmp.ne.s32.totalorder %s98, %s114
    %p116 = scmp.eq.s32.totalorder %s26, 0
    %p117 = por %p115, %p116
    %s118 = ssub.s32 %s28, %s35
    %p119 = scmp.eq.s32.totalorder %s118, 0
    %s121 = sadd.s32 %s120, 1
    %s122 = scalar_select %p119, %s120, %s121
    %p125 = pneg %p119
    %p126 = scmp.eq.s32.totalorder %s20, 3
    %p127 = por %p125, %p126
    %p128 = scmp.ne.s32.totalorder %s120, %s123
    %p129 = scmp.eq.s32.totalorder %s20, 0
    %p130 = por %p128, %p129
    %p131 = scmp.ne.s32.totalorder %s120, %s123
    %p132 = scmp.eq.s32.totalorder %s25, 3
    %p133 = por %p131, %p132
    %p134 = scmp.ne.s32.totalorder %s123, %s124
    %p135 = scmp.eq.s32.totalorder %s25, 0
    %p136 = por %p134, %p135
    %p137 = scmp.ne.s32.totalorder %s123, %s124
    %p138 = scmp.eq.s32.totalorder %s26, 3
    %p139 = por %p137, %p138
    %p141 = scmp.ne.s32.totalorder %s124, %s140
    %p142 = scmp.eq.s32.totalorder %s26, 0
    %p143 = por %p141, %p142
    %s144 = ssub.s32 %s28, %s35
    %p145 = scmp.eq.s32.totalorder %s144, 0
    %s147 = sadd.s32 %s146, 1
    %s148 = scalar_select %p145, %s146, %s147
    %p151 = pneg %p145
    %p152 = scmp.eq.s32.totalorder %s20, 3
    %p153 = por %p151, %p152
    %p154 = scmp.ne.s32.totalorder %s146, %s149
    %p155 = scmp.eq.s32.totalorder %s20, 0
    %p156 = por %p154, %p155
    %p157 = scmp.ne.s32.totalorder %s146, %s149
    %p158 = scmp.eq.s32.totalorder %s25, 3
    %p159 = por %p157, %p158
    %p160 = scmp.ne.s32.totalorder %s149, %s150
    %p161 = scmp.eq.s32.totalorder %s25, 0
    %p162 = por %p160, %p161
    %p163 = scmp.ne.s32.totalorder %s149, %s150
    %p164 = scmp.eq.s32.totalorder %s26, 3
    %p165 = por %p163, %p164
    %p167 = scmp.ne.s32.totalorder %s150, %s166
    %p168 = scmp.eq.s32.totalorder %s26, 0
    %p169 = por %p167, %p168
    %s170 = ssub.s32 %s28, %s35
    %p171 = scmp.eq.s32.totalorder %s170, 0
    %s173 = sadd.s32 %s172, 1
    %s174 = scalar_select %p171, %s172, %s173
    %p177 = pneg %p171
    %p178 = scmp.eq.s32.totalorder %s20, 3
    %p179 = por %p177, %p178
    %p180 = scmp.ne.s32.totalorder %s172, %s175
    %p181 = scmp.eq.s32.totalorder %s20, 0
    %p182 = por %p180, %p181
    %p183 = scmp.ne.s32.totalorder %s172, %s175
    %p184 = scmp.eq.s32.totalorder %s25, 3
    %p185 = por %p183, %p184
    %p186 = scmp.ne.s32.totalorder %s175, %s176
    %p187 = scmp.eq.s32.totalorder %s25, 0
    %p188 = por %p186, %p187
    %p189 = scmp.ne.s32.totalorder %s175, %s176
    %p190 = scmp.eq.s32.totalorder %s26, 3
    %p191 = por %p189, %p190
    %p193 = scmp.ne.s32.totalorder %s176, %s192
    %p194 = scmp.eq.s32.totalorder %s26, 0
    %p195 = por %p193, %p194
    %s196 = ssub.s32 %s28, %s35
    %p197 = scmp.eq.s32.totalorder %s196, 0
    %s199 = sadd.s32 %s198, 1
    %s200 = scalar_select %p197, %s198, %s199
    %p203 = pneg %p197
    %p204 = scmp.eq.s32.totalorder %s20, 3
    %p205 = por %p203, %p204
    %p206 = scmp.ne.s32.totalorder %s198, %s201
    %p207 = scmp.eq.s32.totalorder %s20, 0
    %p208 = por %p206, %p207
    %p209 = scmp.ne.s32.totalorder %s198, %s201
    %p210 = scmp.eq.s32.totalorder %s25, 3
    %p211 = por %p209, %p210
    %p212 = scmp.ne.s32.totalorder %s201, %s202
    %p213 = scmp.eq.s32.totalorder %s25, 0
    %p214 = por %p212, %p213
    %p215 = scmp.ne.s32.totalorder %s201, %s202
    %p216 = scmp.eq.s32.totalorder %s26, 3
    %p217 = por %p215, %p216
    %p219 = scmp.ne.s32.totalorder %s202, %s218
    %p220 = scmp.eq.s32.totalorder %s26, 0
    %p221 = por %p219, %p220
    %s222 = ssub.s32 %s28, %s35
    %p223 = scmp.eq.s32.totalorder %s222, 0
    %s225 = sadd.s32 %s224, 1
    %s226 = scalar_select %p223, %s224, %s225
    %p229 = pneg %p223
    %p230 = scmp.eq.s32.totalorder %s20, 3
    %p231 = por %p229, %p230
    %p232 = scmp.ne.s32.totalorder %s224, %s227
    %p233 = scmp.eq.s32.totalorder %s20, 0
    %p234 = por %p232, %p233
    %p235 = scmp.ne.s32.totalorder %s224, %s227
    %p236 = scmp.eq.s32.totalorder %s25, 3
    %p237 = por %p235, %p236
    %p238 = scmp.ne.s32.totalorder %s227, %s228
    %p239 = scmp.eq.s32.totalorder %s25, 0
    %p240 = por %p238, %p239
    %p241 = scmp.ne.s32.totalorder %s227, %s228
    %p242 = scmp.eq.s32.totalorder %s26, 3
    %p243 = por %p241, %p242
    %p245 = scmp.ne.s32.totalorder %s228, %s244
    %p246 = scmp.eq.s32.totalorder %s26, 0
    %p247 = por %p245, %p246
    %s248 = ssub.s32 %s28, %s35
    %p249 = scmp.eq.s32.totalorder %s248, 0
    %s251 = sadd.s32 %s250, 1
    %s252 = scalar_select %p249, %s250, %s251
    %p255 = pneg %p249
    %p256 = scmp.eq.s32.totalorder %s20, 3
    %p257 = por %p255, %p256
    %p258 = scmp.ne.s32.totalorder %s250, %s253
    %p259 = scmp.eq.s32.totalorder %s20, 0
    %p260 = por %p258, %p259
    %p261 = scmp.ne.s32.totalorder %s250, %s253
    %p262 = scmp.eq.s32.totalorder %s25, 3
    %p263 = por %p261, %p262
    %p264 = scmp.ne.s32.totalorder %s253, %s254
    %p265 = scmp.eq.s32.totalorder %s25, 0
    %p266 = por %p264, %p265
    %p267 = scmp.ne.s32.totalorder %s253, %s254
    %p268 = scmp.eq.s32.totalorder %s26, 3
    %p269 = por %p267, %p268
    %p271 = scmp.ne.s32.totalorder %s254, %s270
    %p272 = scmp.eq.s32.totalorder %s26, 0
    %p273 = por %p271, %p272
    %s274 = ssub.s32 %s28, %s35
    %p275 = scmp.eq.s32.totalorder %s274, 0
    %s277 = sadd.s32 %s276, 1
    %s278 = scalar_select %p275, %s276, %s277
    %p281 = pneg %p275
    %p282 = scmp.eq.s32.totalorder %s20, 3
    %p283 = por %p281, %p282
    %p284 = scmp.ne.s32.totalorder %s276, %s279
    %p285 = scmp.eq.s32.totalorder %s20, 0
    %p286 = por %p284, %p285
    %p287 = scmp.ne.s32.totalorder %s276, %s279
    %p288 = scmp.eq.s32.totalorder %s25, 3
    %p289 = por %p287, %p288
    %p290 = scmp.ne.s32.totalorder %s279, %s280
    %p291 = scmp.eq.s32.totalorder %s25, 0
    %p292 = por %p290, %p291
    %p293 = scmp.ne.s32.totalorder %s279, %s280
    %p294 = scmp.eq.s32.totalorder %s26, 3
    %p295 = por %p293, %p294
    %p297 = scmp.ne.s32.totalorder %s280, %s296
    %p298 = scmp.eq.s32.totalorder %s26, 0
    %p299 = por %p297, %p298
    %s300 = ssub.s32 %s28, %s35
    %p301 = scmp.eq.s32.totalorder %s300, 0
    %s303 = sadd.s32 %s302, 1
    %s304 = scalar_select %p301, %s302, %s303
    %p307 = pneg %p301
    %p308 = scmp.eq.s32.totalorder %s20, 3
    %p309 = por %p307, %p308
    %p310 = scmp.ne.s32.totalorder %s302, %s305
    %p311 = scmp.eq.s32.totalorder %s20, 0
    %p312 = por %p310, %p311
    %p313 = scmp.ne.s32.totalorder %s302, %s305
    %p314 = scmp.eq.s32.totalorder %s25, 3
    %p315 = por %p313, %p314
    %p316 = scmp.ne.s32.totalorder %s305, %s306
    %p317 = scmp.eq.s32.totalorder %s25, 0
    %p318 = por %p316, %p317
    %p319 = scmp.ne.s32.totalorder %s305, %s306
    %p320 = scmp.eq.s32.totalorder %s26, 3
    %p321 = por %p319, %p320
    %p323 = scmp.ne.s32.totalorder %s306, %s322
    %p324 = scmp.eq.s32.totalorder %s26, 0
    %p325 = por %p323, %p324
    %s326 = ssub.s32 %s28, %s35
    %p327 = scmp.eq.s32.totalorder %s326, 0
    %s329 = sadd.s32 %s328, 1
    %s330 = scalar_select %p327, %s328, %s329
    %p333 = pneg %p327
    %p334 = scmp.eq.s32.totalorder %s20, 3
    %p335 = por %p333, %p334
    %p336 = scmp.ne.s32.totalorder %s328, %s331
    %p337 = scmp.eq.s32.totalorder %s20, 0
    %p338 = por %p336, %p337
    %p339 = scmp.ne.s32.totalorder %s328, %s331
    %p340 = scmp.eq.s32.totalorder %s25, 3
    %p341 = por %p339, %p340
    %p342 = scmp.ne.s32.totalorder %s331, %s332
    %p343 = scmp.eq.s32.totalorder %s25, 0
    %p344 = por %p342, %p343
    %p345 = scmp.ne.s32.totalorder %s331, %s332
    %p346 = scmp.eq.s32.totalorder %s26, 3
    %p347 = por %p345, %p346
    %p349 = scmp.ne.s32.totalorder %s332, %s348
    %p350 = scmp.eq.s32.totalorder %s26, 0
    %p351 = por %p349, %p350
    %s352 = ssub.s32 %s28, %s35
    %p353 = scmp.eq.s32.totalorder %s352, 0
    %s355 = sadd.s32 %s354, 1
    %s356 = scalar_select %p353, %s354, %s355
    %p359 = pneg %p353
    %p360 = scmp.eq.s32.totalorder %s20, 3
    %p361 = por %p359, %p360
    %p362 = scmp.ne.s32.totalorder %s354, %s357
    %p363 = scmp.eq.s32.totalorder %s20, 0
    %p364 = por %p362, %p363
    %p365 = scmp.ne.s32.totalorder %s354, %s357
    %p366 = scmp.eq.s32.totalorder %s25, 3
    %p367 = por %p365, %p366
    %p368 = scmp.ne.s32.totalorder %s357, %s358
    %p369 = scmp.eq.s32.totalorder %s25, 0
    %p370 = por %p368, %p369
    %p371 = scmp.ne.s32.totalorder %s357, %s358
    %p372 = scmp.eq.s32.totalorder %s26, 3
    %p373 = por %p371, %p372
    %p375 = scmp.ne.s32.totalorder %s358, %s374
    %p376 = scmp.eq.s32.totalorder %s26, 0
    %p377 = por %p375, %p376
    %s378 = ssub.s32 %s28, %s35
    %p379 = scmp.eq.s32.totalorder %s378, 0
    %s381 = sadd.s32 %s380, 1
    %s382 = scalar_select %p379, %s380, %s381
    %p385 = pneg %p379
    %p386 = scmp.eq.s32.totalorder %s20, 3
    %p387 = por %p385, %p386
    %p388 = scmp.ne.s32.totalorder %s380, %s383
    %p389 = scmp.eq.s32.totalorder %s20, 0
    %p390 = por %p388, %p389
    %p391 = scmp.ne.s32.totalorder %s380, %s383
    %p392 = scmp.eq.s32.totalorder %s25, 3
    %p393 = por %p391, %p392
    %p394 = scmp.ne.s32.totalorder %s383, %s384
    %p395 = scmp.eq.s32.totalorder %s25, 0
    %p396 = por %p394, %p395
    %p397 = scmp.ne.s32.totalorder %s383, %s384
    %p398 = scmp.eq.s32.totalorder %s26, 3
    %p399 = por %p397, %p398
    %p401 = scmp.ne.s32.totalorder %s384, %s400
    %p402 = scmp.eq.s32.totalorder %s26, 0
    %p403 = por %p401, %p402
    %s404 = ssub.s32 %s27, %s39
    %p405 = scmp.eq.s32.totalorder %s404, 0
    %s407 = sadd.s32 %s406, 1
    %s408 = scalar_select %p405, %s406, %s407
    %p411 = pneg %p405
    %p412 = scmp.eq.s32.totalorder %s20, 3
    %p413 = por %p411, %p412
    %p414 = scmp.ne.s32.totalorder %s406, %s409
    %p415 = scmp.eq.s32.totalorder %s20, 0
    %p416 = por %p414, %p415
    %p417 = scmp.ne.s32.totalorder %s406, %s409
    %p418 = scmp.eq.s32.totalorder %s25, 3
    %p419 = por %p417, %p418
    %p420 = scmp.ne.s32.totalorder %s409, %s410
    %p421 = scmp.eq.s32.totalorder %s25, 0
    %p422 = por %p420, %p421
    %p423 = scmp.ne.s32.totalorder %s409, %s410
    %p424 = scmp.eq.s32.totalorder %s26, 3
    %p425 = por %p423, %p424
    %p427 = scmp.ne.s32.totalorder %s410, %s426
    %p428 = scmp.eq.s32.totalorder %s26, 0
    %p429 = por %p427, %p428
    %p430 = scmp.le.s32.totalorder 1, %s20
    %p431 = scmp.lt.s32.totalorder %s20, 5
    %p432 = pnand %p430, %p431
    %p433 = pneg %p432
    // Predicated region
    $region9: #{encoder_forward.1} parent=5 // pred_check
      _
    $region10: #{encoder_forward.1} parent=5 // pred_check_branch
      %435 = sbr.rel (%p432) target = $region12
    $region11: #{encoder_forward.1} parent=5 // pred_region
      %s436 = ssub.s32 %s20, 1
    $region12: #{encoder_forward.1} parent=5 // pred_fallthru
      _
    %p437 = scmp.lt.s32.totalorder %s20, 4
    // Predicated region
    $region13: #{encoder_forward.1} parent=5 // pred_check
      %p438 = pneg %p437
    $region14: #{encoder_forward.1} parent=5 // pred_check_branch
      %440 = sbr.rel (%p438) target = $region16
    $region15: #{encoder_forward.1} parent=5 // pred_region
      // Predicated region
      $region17: #{encoder_forward.1} parent=15 // pred_check
        %p441 = pneg %p52
      $region18: #{encoder_forward.1} parent=15 // pred_check_branch
        %443 = sbr.rel (%p441) target = $region20
      $region19: #{encoder_forward.1} parent=15 // pred_region
        %p444 = scmp.lt.s32.totalorder %s27, 1
        %s445 = scalar_select %p444, %s27, 1
        %s446 = smul.addr %s445, 8
        %s447 = scalar_lea.vmem %s0, %s446
      $region20: #{encoder_forward.1} parent=15 // pred_fallthru
        _
      // Predicated region
      $region21: #{encoder_forward.1} parent=15 // pred_check
        %p448 = pneg %p78
      $region22: #{encoder_forward.1} parent=15 // pred_check_branch
        %450 = sbr.rel (%p448) target = $region24
      $region23: #{encoder_forward.1} parent=15 // pred_region
        %p451 = scmp.lt.s32.totalorder %s27, 1
        %s452 = scalar_select %p451, %s27, 1
        %s453 = scalar_lea.vmem %s1, %s452
      $region24: #{encoder_forward.1} parent=15 // pred_fallthru
        _
      // Predicated region
      $region25: #{encoder_forward.1} parent=15 // pred_check
        %p454 = pneg %p104
      $region26: #{encoder_forward.1} parent=15 // pred_check_branch
        %456 = sbr.rel (%p454) target = $region28
      $region27: #{encoder_forward.1} parent=15 // pred_region
        %p457 = scmp.lt.s32.totalorder %s28, 1
        %s458 = scalar_select %p457, %s28, 1
        %s459 = smul.addr %s458, 4
        %s460 = smul.addr %s459, 4
        %s461 = scalar_lea.vmem %s2, %s460
      $region28: #{encoder_forward.1} parent=15 // pred_fallthru
        _
      // Predicated region
      $region29: #{encoder_forward.1} parent=15 // pred_check
        %p462 = pneg %p130
      $region30: #{encoder_forward.1} parent=15 // pred_check_branch
        %464 = sbr.rel (%p462) target = $region32
      $region31: #{encoder_forward.1} parent=15 // pred_region
        %p465 = scmp.lt.s32.totalorder %s28, 1
        %s466 = scalar_select %p465, %s28, 1
        %s467 = scalar_lea.vmem %s3, %s466
      $region32: #{encoder_forward.1} parent=15 // pred_fallthru
        _
      // Predicated region
      $region33: #{encoder_forward.1} parent=15 // pred_check
        %p468 = pneg %p156
      $region34: #{encoder_forward.1} parent=15 // pred_check_branch
        %470 = sbr.rel (%p468) target = $region36
      $region35: #{encoder_forward.1} parent=15 // pred_region
        %p471 = scmp.lt.s32.totalorder %s28, 1
        %s472 = scalar_select %p471, %s28, 1
        %s473 = smul.addr %s472, 4
        %s474 = smul.addr %s473, 4
        %s475 = scalar_lea.vmem %s4, %s474
      $region36: #{encoder_forward.1} parent=15 // pred_fallthru
        _
      // Predicated region
      $region37: #{encoder_forward.1} parent=15 // pred_check
        %p476 = pneg %p182
      $region38: #{encoder_forward.1} parent=15 // pred_check_branch
        %478 = sbr.rel (%p476) target = $region40
      $region39: #{encoder_forward.1} parent=15 // pred_region
        %p479 = scmp.lt.s32.totalorder %s28, 1
        %s480 = scalar_select %p479, %s28, 1
        %s481 = scalar_lea.vmem %s5, %s480
      $region40: #{encoder_forward.1} parent=15 // pred_fallthru
        _
      // Predicated region
      $region41: #{encoder_forward.1} parent=15 // pred_check
        %p482 = pneg %p208
      $region42: #{encoder_forward.1} parent=15 // pred_check_branch
        %484 = sbr.rel (%p482) target = $region44
      $region43: #{encoder_forward.1} parent=15 // pred_region
        %p485 = scmp.lt.s32.totalorder %s28, 1
        %s486 = scalar_select %p485, %s28, 1
        %s487 = scalar_lea.vmem %s6, %s486
      $region44: #{encoder_forward.1} parent=15 // pred_fallthru
        _
      // Predicated region
      $region45: #{encoder_forward.1} parent=15 // pred_check
        %p488 = pneg %p234
      $region46: #{encoder_forward.1} parent=15 // pred_check_branch
        %490 = sbr.rel (%p488) target = $region48
      $region47: #{encoder_forward.1} parent=15 // pred_region
        %p491 = scmp.lt.s32.totalorder %s28, 1
        %s492 = scalar_select %p491, %s28, 1
        %s493 = scalar_lea.vmem %s7, %s492
      $region48: #{encoder_forward.1} parent=15 // pred_fallthru
        _
      // Predicated region
      $region49: #{encoder_forward.1} parent=15 // pred_check
        %p494 = pneg %p260
      $region50: #{encoder_forward.1} parent=15 // pred_check_branch
        %496 = sbr.rel (%p494) target = $region52
      $region51: #{encoder_forward.1} parent=15 // pred_region
        %p497 = scmp.lt.s32.totalorder %s28, 1
        %s498 = scalar_select %p497, %s28, 1
        %s499 = smul.addr %s498, 4
        %s500 = smul.addr %s499, 4
        %s501 = scalar_lea.vmem %s8, %s500
      $region52: #{encoder_forward.1} parent=15 // pred_fallthru
        _
      // Predicated region
      $region53: #{encoder_forward.1} parent=15 // pred_check
        %p502 = pneg %p286
      $region54: #{encoder_forward.1} parent=15 // pred_check_branch
        %504 = sbr.rel (%p502) target = $region56
      $region55: #{encoder_forward.1} parent=15 // pred_region
        %p505 = scmp.lt.s32.totalorder %s28, 1
        %s506 = scalar_select %p505, %s28, 1
        %s507 = scalar_lea.vmem %s9, %s506
      $region56: #{encoder_forward.1} parent=15 // pred_fallthru
        _
      // Predicated region
      $region57: #{encoder_forward.1} parent=15 // pred_check
        %p508 = pneg %p312
      $region58: #{encoder_forward.1} parent=15 // pred_check_branch
        %510 = sbr.rel (%p508) target = $region60
      $region59: #{encoder_forward.1} parent=15 // pred_region
        %p511 = scmp.lt.s32.totalorder %s28, 1
        %s512 = scalar_select %p511, %s28, 1
        %s513 = smul.addr %s512, 8
        %s514 = smul.addr %s513, 4
        %s515 = scalar_lea.vmem %s10, %s514
      $region60: #{encoder_forward.1} parent=15 // pred_fallthru
        _
      // Predicated region
      $region61: #{encoder_forward.1} parent=15 // pred_check
        %p516 = pneg %p338
      $region62: #{encoder_forward.1} parent=15 // pred_check_branch
        %518 = sbr.rel (%p516) target = $region64
      $region63: #{encoder_forward.1} parent=15 // pred_region
        %p519 = scmp.lt.s32.totalorder %s28, 1
        %s520 = scalar_select %p519, %s28, 1
        %s521 = scalar_lea.vmem %s11, %s520
      $region64: #{encoder_forward.1} parent=15 // pred_fallthru
        _
      // Predicated region
      $region65: #{encoder_forward.1} parent=15 // pred_check
        %p522 = pneg %p364
      $region66: #{encoder_forward.1} parent=15 // pred_check_branch
        %524 = sbr.rel (%p522) target = $region68
      $region67: #{encoder_forward.1} parent=15 // pred_region
        %p525 = scmp.lt.s32.totalorder %s28, 1
        %s526 = scalar_select %p525, %s28, 1
        %s527 = scalar_lea.vmem %s12, %s526
      $region68: #{encoder_forward.1} parent=15 // pred_fallthru
        _
      // Predicated region
      $region69: #{encoder_forward.1} parent=15 // pred_check
        %p528 = pneg %p390
      $region70: #{encoder_forward.1} parent=15 // pred_check_branch
        %530 = sbr.rel (%p528) target = $region72
      $region71: #{encoder_forward.1} parent=15 // pred_region
        %p531 = scmp.lt.s32.totalorder %s28, 1
        %s532 = scalar_select %p531, %s28, 1
        %s533 = scalar_lea.vmem %s13, %s532
      $region72: #{encoder_forward.1} parent=15 // pred_fallthru
        _
    $region16: #{encoder_forward.1} parent=5 // pred_fallthru
      _
    %p534 = scmp.le.s32.totalorder 1, %s20
    %p535 = scmp.lt.s32.totalorder %s20, 5
    %p536 = pnand %p534, %p535
    %p537 = pneg %p536
    // Predicated region
    $region73: #{encoder_forward.1} parent=5 // pred_check
      _
    $region74: #{encoder_forward.1} parent=5 // pred_check_branch
      %539 = sbr.rel (%p536) target = $region76
    $region75: #{encoder_forward.1} parent=5 // pred_region
      %s540 = ssub.s32 %s20, 1
      %p541 = scmp.lt.s32.totalorder %s29, 1
      %s542 = scalar_select %p541, %s29, 1
      %s543 = smul.addr %s542, 8
      %s544 = scalar_lea.vmem %s0, %s543
      %p545 = pneg %p58
      %p546 = pneg %p55
      %p547 = scmp.lt.s32.totalorder %s29, 1
      %s548 = scalar_select %p547, %s29, 1
      %s549 = scalar_lea.vmem %s1, %s548
      %p550 = pneg %p84
      %p551 = pneg %p81
      %p552 = scmp.lt.s32.totalorder %s30, 1
      %s553 = scalar_select %p552, %s30, 1
      %s554 = smul.addr %s553, 4
      %s555 = smul.addr %s554, 4
      %s556 = scalar_lea.vmem %s2, %s555
      %p557 = pneg %p110
      %p558 = pneg %p107
      %p559 = scmp.lt.s32.totalorder %s30, 1
      %s560 = scalar_select %p559, %s30, 1
      %s561 = scalar_lea.vmem %s3, %s560
      %p562 = pneg %p136
      %p563 = pneg %p133
      %p564 = scmp.lt.s32.totalorder %s30, 1
      %s565 = scalar_select %p564, %s30, 1
      %s566 = smul.addr %s565, 4
      %s567 = smul.addr %s566, 4
      %s568 = scalar_lea.vmem %s4, %s567
      %p569 = pneg %p162
      %p570 = pneg %p159
      %p571 = scmp.lt.s32.totalorder %s30, 1
      %s572 = scalar_select %p571, %s30, 1
      %s573 = scalar_lea.vmem %s5, %s572
      %p574 = pneg %p188
      %p575 = pneg %p185
      %p576 = scmp.lt.s32.totalorder %s30, 1
      %s577 = scalar_select %p576, %s30, 1
      %s578 = scalar_lea.vmem %s6, %s577
      %p579 = pneg %p214
      %p580 = pneg %p211
      %p581 = scmp.lt.s32.totalorder %s30, 1
      %s582 = scalar_select %p581, %s30, 1
      %s583 = scalar_lea.vmem %s7, %s582
      %p584 = pneg %p240
      %p585 = pneg %p237
      %p586 = scmp.lt.s32.totalorder %s30, 1
      %s587 = scalar_select %p586, %s30, 1
      %s588 = smul.addr %s587, 4
      %s589 = smul.addr %s588, 4
      %s590 = scalar_lea.vmem %s8, %s589
      %p591 = pneg %p266
      %p592 = pneg %p263
      %p593 = scmp.lt.s32.totalorder %s30, 1
      %s594 = scalar_select %p593, %s30, 1
      %s595 = scalar_lea.vmem %s9, %s594
      %p596 = pneg %p292
      %p597 = pneg %p289
      %p598 = scmp.lt.s32.totalorder %s30, 1
      %s599 = scalar_select %p598, %s30, 1
      %s600 = smul.addr %s599, 8
      %s601 = smul.addr %s600, 4
      %s602 = scalar_lea.vmem %s10, %s601
      %p603 = pneg %p318
      %p604 = pneg %p315
      %p605 = scmp.lt.s32.totalorder %s30, 1
      %s606 = scalar_select %p605, %s30, 1
      %s607 = scalar_lea.vmem %s11, %s606
      %p608 = pneg %p344
      %p609 = pneg %p341
      %p610 = scmp.lt.s32.totalorder %s30, 1
      %s611 = scalar_select %p610, %s30, 1
      %s612 = scalar_lea.vmem %s12, %s611
      %p613 = pneg %p370
      %p614 = pneg %p367
      %p615 = scmp.lt.s32.totalorder %s30, 1
      %s616 = scalar_select %p615, %s30, 1
      %s617 = scalar_lea.vmem %s13, %s616
      %p618 = pneg %p396
      %p619 = pneg %p393
      %p620 = pneg %p422
      %p621 = pneg %p419
      %p622 = scmp.lt.s32.totalorder %s29, 1
      %s623 = scalar_select %p622, %s29, 1
      %s624 = smul.addr %s623, 8
      %s625 = scalar_lea.vmem %s14, %s624
      %p626 = scmp.lt.s32.totalorder %s29, 1
      %s627 = scalar_select %p626, %s29, 1
      %s628 = smul.addr %s627, 8
      %s629 = scalar_lea.vmem %s0, %s628
      %p630 = scmp.lt.s32.totalorder %s29, 1
      %s631 = scalar_select %p630, %s29, 1
      %s632 = scalar_lea.vmem %s1, %s631
      %p633 = scmp.lt.s32.totalorder %s30, 1
      %s634 = scalar_select %p633, %s30, 1
      %s635 = smul.addr %s634, 4
      %s636 = smul.addr %s635, 4
      %s637 = scalar_lea.vmem %s2, %s636
      %p638 = scmp.lt.s32.totalorder %s30, 1
      %s639 = scalar_select %p638, %s30, 1
      %s640 = scalar_lea.vmem %s3, %s639
      %p641 = scmp.lt.s32.totalorder %s30, 1
      %s642 = scalar_select %p641, %s30, 1
      %s643 = smul.addr %s642, 4
      %s644 = smul.addr %s643, 4
      %s645 = scalar_lea.vmem %s4, %s644
      %p646 = scmp.lt.s32.totalorder %s30, 1
      %s647 = scalar_select %p646, %s30, 1
      %s648 = scalar_lea.vmem %s5, %s647
      %p649 = scmp.lt.s32.totalorder %s30, 1
      %s650 = scalar_select %p649, %s30, 1
      %s651 = scalar_lea.vmem %s6, %s650
      %p652 = scmp.lt.s32.totalorder %s30, 1
      %s653 = scalar_select %p652, %s30, 1
      %s654 = scalar_lea.vmem %s7, %s653
      %p655 = scmp.lt.s32.totalorder %s30, 1
      %s656 = scalar_select %p655, %s30, 1
      %s657 = smul.addr %s656, 4
      %s658 = smul.addr %s657, 4
      %s659 = scalar_lea.vmem %s8, %s658
      %p660 = scmp.lt.s32.totalorder %s30, 1
      %s661 = scalar_select %p660, %s30, 1
      %s662 = scalar_lea.vmem %s9, %s661
      %p663 = scmp.lt.s32.totalorder %s30, 1
      %s664 = scalar_select %p663, %s30, 1
      %s665 = smul.addr %s664, 8
      %s666 = smul.addr %s665, 4
      %s667 = scalar_lea.vmem %s10, %s666
      %p668 = scmp.lt.s32.totalorder %s30, 1
      %s669 = scalar_select %p668, %s30, 1
      %s670 = scalar_lea.vmem %s11, %s669
      %p671 = scmp.lt.s32.totalorder %s30, 1
      %s672 = scalar_select %p671, %s30, 1
      %s673 = scalar_lea.vmem %s12, %s672
      %p674 = scmp.lt.s32.totalorder %s30, 1
      %s675 = scalar_select %p674, %s30, 1
      %s676 = scalar_lea.vmem %s13, %s675
      %p677 = scmp.lt.s32.totalorder %s29, 1
      %s678 = scalar_select %p677, %s29, 1
      %s679 = smul.addr %s678, 8
      %s680 = scalar_lea.vmem %s14, %s679
      %p682 = scmp.eq.s32.totalorder %s30, 0
      // Predicated region
      $region77: #{encoder_forward.1} parent=75 // pred_check
        %p683 = pneg %p682
      $region78: #{encoder_forward.1} parent=75 // pred_check_branch
        %685 = sbr.rel (%p683) target = $region80
      $region79: #{encoder_forward.1} parent=75 // pred_region
        %v686 = vld [vmem:[%s629] sm:$0xff]
        %vm687 = vcmask 261120
        %688 = vst.msk [vmem:[%s680] sm:$0xff] %vm687, %v686
      $region80: #{encoder_forward.1} parent=75 // pred_fallthru
        _
      %v689 = vld [vmem:[%s680] sm:$0xff]
      %v690 = vpack.c.bf16 %v689, %v689
      %v691 = vld [vmem:[%s637] sm:$0xf]
      %v692 = vld [vmem:[%s637 + $0x4] sm:$0xf]
      %v693 = vld [vmem:[%s637 + $0x8] sm:$0xf]
      %v694 = vld [vmem:[%s637 + $0xc] sm:$0xf]
      %v695 = vld [vmem:[%s640] sm:$0x1]
      %v697 = vlaneseq
      %v698 = vshrl.u32 %v697, 7
      %v699 = vsub.s32 0, %v698
      %v700 = vrot.slane %v695, %v699
      %v706 = vunpack.c.l.b16 %v691
      %v707 = vunpack.c.l.b16 %v692
      %v708 = vunpack.c.l.b16 %v693
      %v709 = vunpack.c.l.b16 %v694
      %v710 = vpack.c.b16 %v707, %v706
      %v711 = vpack.c.b16 %v709, %v708
      %vm714 = vcmask 261120
      %v716 = vsel %vm714, %v690, 0
      %718 = vmatprep.subr.bf16.mxu0 0
      %719 = vmatpush1.bf16.msra.mxu0 %v710
      %720 = vmatprep.subr.bf16.mxu0 0
      %721 = vmatpush1.bf16.msra.mxu0 %v711
      %722 = vmatprep.subr.bf16.mxu0 0
      %723 = vmatpush1.bf16.msra.mxu0 0
      %724 = vmatprep.subr.bf16.mxu0 0
      %725 = vmatpush1.bf16.msra.mxu0 0
      %726 = vmatprep.subr.bf16.mxu0 0
      %727 = vmatpush1.bf16.msra.mxu0 0
      %728 = vmatprep.subr.bf16.mxu0 0
      %729 = vmatpush1.bf16.msra.mxu0 0
      %730 = vmatprep.subr.bf16.mxu0 0
      %731 = vmatpush1.bf16.msra.mxu0 0
      %732 = vmatprep.subr.bf16.mxu0 0
      %733 = vmatpush1.bf16.msra.mxu0 0
      %734 = vmatprep.subr.bf16.mxu0 0
      %735 = vmatpush1.bf16.msra.mxu0 0
      %736 = vmatprep.subr.bf16.mxu0 0
      %737 = vmatpush1.bf16.msra.mxu0 0
      %738 = vmatprep.subr.bf16.mxu0 0
      %739 = vmatpush1.bf16.msra.mxu0 0
      %740 = vmatprep.subr.bf16.mxu0 0
      %741 = vmatpush1.bf16.msra.mxu0 0
      %742 = vmatprep.subr.bf16.mxu0 0
      %743 = vmatpush1.bf16.msra.mxu0 0
      %744 = vmatprep.subr.bf16.mxu0 0
      %745 = vmatpush1.bf16.msra.mxu0 0
      %746 = vmatprep.subr.bf16.mxu0 0
      %747 = vmatpush1.bf16.msra.mxu0 0
      %748 = vmatprep.subr.bf16.mxu0 0
      %749 = vmatpush1.bf16.msra.mxu0 0
      %750 = vmatprep.mubr.bf16.mxu0 0
      %751 = vmatmul.mubr.bf16.gmra.mrb[0].mxu0 %v716
      %v752 = vpop.f32.mrb[0].mxu0
      %v753 = vadd.f32 %v700, %v752
      %v754 = vpop.f32.mrb[0].mxu0
      %v755 = vpop.f32.mrb[0].mxu0
      %v756 = vpop.f32.mrb[0].mxu0
      %757 = vdwg.mxu0
      %v758 = vpack.c.bf16 %v753, %v753
      %760 = vrot.lane.b32.xlu0 %v758, 112
      %v761 = vpop.permute.xlu0 %760
      %v762 = vld [vmem:[%s632] sm:$0x1]
      %v764 = vlaneseq
      %v765 = vshrl.u32 %v764, 7
      %v766 = vsub.s32 0, %v765
      %v767 = vrot.slane %v762, %v766
      %769 = vrot.lane.b32.xlu0 %v758, 96
      %v770 = vpop.permute.xlu0 %769
      %vm771 = vcmask 130048
      %v773 = vsel %vm771, %v758, 0
      %v776 = vsel %vm771, %v770, 0
      %778 = vmatprep.subr.bf16.mxu0 0
      %779 = vmatpush1.bf16.xpose.msra.mxu0 %v776
      %780 = vmatprep.subr.bf16.mxu0 0
      %781 = vmatpush1.bf16.xpose.msra.mxu0 0
      %782 = vmatprep.subr.bf16.mxu0 0
      %783 = vmatpush1.bf16.xpose.msra.mxu0 0
      %784 = vmatprep.subr.bf16.mxu0 0
      %785 = vmatpush1.bf16.xpose.msra.mxu0 0
      %786 = vmatprep.subr.bf16.mxu0 0
      %787 = vmatpush1.bf16.xpose.msra.mxu0 0
      %788 = vmatprep.subr.bf16.mxu0 0
      %789 = vmatpush1.bf16.xpose.msra.mxu0 0
      %790 = vmatprep.subr.bf16.mxu0 0
      %791 = vmatpush1.bf16.xpose.msra.mxu0 0
      %792 = vmatprep.subr.bf16.mxu0 0
      %793 = vmatpush1.bf16.xpose.msra.mxu0 0
      %794 = vmatprep.subr.bf16.mxu0 0
      %795 = vmatpush1.bf16.xpose.msra.mxu0 0
      %796 = vmatprep.subr.bf16.mxu0 0
      %797 = vmatpush1.bf16.xpose.msra.mxu0 0
      %798 = vmatprep.subr.bf16.mxu0 0
      %799 = vmatpush1.bf16.xpose.msra.mxu0 0
      %800 = vmatprep.subr.bf16.mxu0 0
      %801 = vmatpush1.bf16.xpose.msra.mxu0 0
      %802 = vmatprep.subr.bf16.mxu0 0
      %803 = vmatpush1.bf16.xpose.msra.mxu0 0
      %804 = vmatprep.subr.bf16.mxu0 0
      %805 = vmatpush1.bf16.xpose.msra.mxu0 0
      %806 = vmatprep.subr.bf16.mxu0 0
      %807 = vmatpush1.bf16.xpose.msra.mxu0 0
      %808 = vmatprep.subr.bf16.mxu0 0
      %809 = vmatpush1.bf16.xpose.msra.mxu0 0
      %810 = vmatprep.mubr.bf16.mxu0 0
      %811 = vmatmul.mubr.bf16.gmra.mrb[0].mxu0 %v773
      %v812 = vpop.f32.mrb[0].mxu0
      %v813 = vadd.f32 %v767, %v812
      %v814 = vpop.f32.mrb[0].mxu0
      %v815 = vpop.f32.mrb[0].mxu0
      %v816 = vpop.f32.mrb[0].mxu0
      %817 = vdwg.mxu0
      %818 = vrot.lane.b32.xlu0 %v761, 96
      %v819 = vpop.permute.xlu0 %818
      %v821 = vsel %vm771, %v761, 0
      %v824 = vsel %vm771, %v819, 0
      %826 = vmatprep.subr.bf16.mxu0 0
      %827 = vmatpush1.bf16.xpose.msra.mxu0 %v824
      %828 = vmatprep.subr.bf16.mxu0 0
      %829 = vmatpush1.bf16.xpose.msra.mxu0 0
      %830 = vmatprep.subr.bf16.mxu0 0
      %831 = vmatpush1.bf16.xpose.msra.mxu0 0
      %832 = vmatprep.subr.bf16.mxu0 0
      %833 = vmatpush1.bf16.xpose.msra.mxu0 0
      %834 = vmatprep.subr.bf16.mxu0 0
      %835 = vmatpush1.bf16.xpose.msra.mxu0 0
      %836 = vmatprep.subr.bf16.mxu0 0
      %837 = vmatpush1.bf16.xpose.msra.mxu0 0
      %838 = vmatprep.subr.bf16.mxu0 0
      %839 = vmatpush1.bf16.xpose.msra.mxu0 0
      %840 = vmatprep.subr.bf16.mxu0 0
      %841 = vmatpush1.bf16.xpose.msra.mxu0 0
      %842 = vmatprep.subr.bf16.mxu0 0
      %843 = vmatpush1.bf16.xpose.msra.mxu0 0
      %844 = vmatprep.subr.bf16.mxu0 0
      %845 = vmatpush1.bf16.xpose.msra.mxu0 0
      %846 = vmatprep.subr.bf16.mxu0 0
      %847 = vmatpush1.bf16.xpose.msra.mxu0 0
      %848 = vmatprep.subr.bf16.mxu0 0
      %849 = vmatpush1.bf16.xpose.msra.mxu0 0
      %850 = vmatprep.subr.bf16.mxu0 0
      %851 = vmatpush1.bf16.xpose.msra.mxu0 0
      %852 = vmatprep.subr.bf16.mxu0 0
      %853 = vmatpush1.bf16.xpose.msra.mxu0 0
      %854 = vmatprep.subr.bf16.mxu0 0
      %855 = vmatpush1.bf16.xpose.msra.mxu0 0
      %856 = vmatprep.subr.bf16.mxu0 0
      %857 = vmatpush1.bf16.xpose.msra.mxu0 0
      %858 = vmatprep.mubr.bf16.mxu0 0
      %859 = vmatmul.mubr.bf16.gmra.mrb[0].mxu0 %v821
      %v860 = vpop.f32.mrb[0].mxu0
      %v861 = vadd.f32 %v767, %v860
      %v862 = vpop.f32.mrb[0].mxu0
      %v863 = vpop.f32.mrb[0].mxu0
      %v864 = vpop.f32.mrb[0].mxu0
      %865 = vdwg.mxu0
      %vm866 = vcmask 64512
      %v867 = vsel %vm866, %v813, -inf
      %868 = vmax.xlane.f32.xlu0 %v867
      %v869 = vpop.xlane.xlu0 %868
      %v870 = vsel %vm866, %v861, -inf
      %871 = vmax.xlane.f32.xlu0 %v870
      %v872 = vpop.xlane.xlu0 %871
      %v873 = vsub.f32 %v813, %v869
      %v874 = vsub.f32 %v861, %v872
      %v875 = vmul.f32 %v873, 1.442695
      %v876 = vpow.pop %v875
      %v877 = vmul.f32 %v874, 1.442695
      %v878 = vpow.pop %v877
      %v879 = vsel %vm866, %v876, 0.0
      %880 = vadd.xlane.f32.xlu0 %v879
      %v881 = vpop.xlane.xlu0 %880
      %v882 = vsel %vm866, %v878, 0.0
      %883 = vadd.xlane.f32.xlu0 %v882
      %v884 = vpop.xlane.xlu0 %883
      %v885 = vrcp.pop %v881
      %v886 = vrcp.pop %v884
      %v887 = vmul.f32 %v876, %v885
      %v888 = vmul.f32 %v878, %v886
      %v889 = vpack.c.bf16 %v887, %v887
      %v890 = vpack.c.bf16 %v888, %v888
      %891 = vrot.lane.b32.xlu0 %v758, 64
      %v892 = vpop.permute.xlu0 %891
      %v894 = vsel %vm866, %v889, 0
      %vm896 = vcmask 1043456
      %v898 = vsel %vm896, %v892, 0
      %900 = vmatprep.subr.bf16.mxu0 0
      %901 = vmatpush1.bf16.msra.mxu0 %v898
      %902 = vmatprep.subr.bf16.mxu0 0
      %903 = vmatpush1.bf16.msra.mxu0 0
      %904 = vmatprep.subr.bf16.mxu0 0
      %905 = vmatpush1.bf16.msra.mxu0 0
      %906 = vmatprep.subr.bf16.mxu0 0
      %907 = vmatpush1.bf16.msra.mxu0 0
      %908 = vmatprep.subr.bf16.mxu0 0
      %909 = vmatpush1.bf16.msra.mxu0 0
      %910 = vmatprep.subr.bf16.mxu0 0
      %911 = vmatpush1.bf16.msra.mxu0 0
      %912 = vmatprep.subr.bf16.mxu0 0
      %913 = vmatpush1.bf16.msra.mxu0 0
      %914 = vmatprep.subr.bf16.mxu0 0
      %915 = vmatpush1.bf16.msra.mxu0 0
      %916 = vmatprep.subr.bf16.mxu0 0
      %917 = vmatpush1.bf16.msra.mxu0 0
      %918 = vmatprep.subr.bf16.mxu0 0
      %919 = vmatpush1.bf16.msra.mxu0 0
      %920 = vmatprep.subr.bf16.mxu0 0
      %921 = vmatpush1.bf16.msra.mxu0 0
      %922 = vmatprep.subr.bf16.mxu0 0
      %923 = vmatpush1.bf16.msra.mxu0 0
      %924 = vmatprep.subr.bf16.mxu0 0
      %925 = vmatpush1.bf16.msra.mxu0 0
      %926 = vmatprep.subr.bf16.mxu0 0
      %927 = vmatpush1.bf16.msra.mxu0 0
      %928 = vmatprep.subr.bf16.mxu0 0
      %929 = vmatpush1.bf16.msra.mxu0 0
      %930 = vmatprep.subr.bf16.mxu0 0
      %931 = vmatpush1.bf16.msra.mxu0 0
      %932 = vmatprep.mubr.bf16.mxu0 0
      %933 = vmatmul.mubr.bf16.gmra.mrb[0].mxu0 %v894
      %v934 = vpop.f32.mrb[0].mxu0
      %v935 = vadd.f32 0.0, %v934
      %v936 = vpop.f32.mrb[0].mxu0
      %v937 = vpop.f32.mrb[0].mxu0
      %v938 = vpop.f32.mrb[0].mxu0
      %939 = vdwg.mxu0
      %940 = vrot.lane.b32.xlu0 %v761, 64
      %v941 = vpop.permute.xlu0 %940
      %v943 = vsel %vm866, %v890, 0
      %v946 = vsel %vm896, %v941, 0
      %948 = vmatprep.subr.bf16.mxu0 0
      %949 = vmatpush1.bf16.msra.mxu0 %v946
      %950 = vmatprep.subr.bf16.mxu0 0
      %951 = vmatpush1.bf16.msra.mxu0 0
      %952 = vmatprep.subr.bf16.mxu0 0
      %953 = vmatpush1.bf16.msra.mxu0 0
      %954 = vmatprep.subr.bf16.mxu0 0
      %955 = vmatpush1.bf16.msra.mxu0 0
      %956 = vmatprep.subr.bf16.mxu0 0
      %957 = vmatpush1.bf16.msra.mxu0 0
      %958 = vmatprep.subr.bf16.mxu0 0
      %959 = vmatpush1.bf16.msra.mxu0 0
      %960 = vmatprep.subr.bf16.mxu0 0
      %961 = vmatpush1.bf16.msra.mxu0 0
      %962 = vmatprep.subr.bf16.mxu0 0
      %963 = vmatpush1.bf16.msra.mxu0 0
      %964 = vmatprep.subr.bf16.mxu0 0
      %965 = vmatpush1.bf16.msra.mxu0 0
      %966 = vmatprep.subr.bf16.mxu0 0
      %967 = vmatpush1.bf16.msra.mxu0 0
      %968 = vmatprep.subr.bf16.mxu0 0
      %969 = vmatpush1.bf16.msra.mxu0 0
      %970 = vmatprep.subr.bf16.mxu0 0
      %971 = vmatpush1.bf16.msra.mxu0 0
      %972 = vmatprep.subr.bf16.mxu0 0
      %973 = vmatpush1.bf16.msra.mxu0 0
      %974 = vmatprep.subr.bf16.mxu0 0
      %975 = vmatpush1.bf16.msra.mxu0 0
      %976 = vmatprep.subr.bf16.mxu0 0
      %977 = vmatpush1.bf16.msra.mxu0 0
      %978 = vmatprep.subr.bf16.mxu0 0
      %979 = vmatpush1.bf16.msra.mxu0 0
      %980 = vmatprep.mubr.bf16.mxu0 0
      %981 = vmatmul.mubr.bf16.gmra.mrb[0].mxu0 %v943
      %v982 = vpop.f32.mrb[0].mxu0
      %v983 = vadd.f32 0.0, %v982
      %v984 = vpop.f32.mrb[0].mxu0
      %v985 = vpop.f32.mrb[0].mxu0
      %v986 = vpop.f32.mrb[0].mxu0
      %987 = vdwg.mxu0
      %989 = vrot.lane.b32.xlu0 %v983, 16
      %v990 = vpop.permute.xlu0 %989
      %v992 = vsel %vm771, %v935, %v990
      %v993 = vpack.c.bf16 %v992, %v992
      %v994 = vld [vmem:[%s645] sm:$0xf]
      %v995 = vld [vmem:[%s645 + $0x4] sm:$0xf]
      %v996 = vld [vmem:[%s645 + $0x8] sm:$0xf]
      %v997 = vld [vmem:[%s645 + $0xc] sm:$0xf]
      %v998 = vld [vmem:[%s648] sm:$0x1]
      %v1000 = vlaneseq
      %v1001 = vshrl.u32 %v1000, 7
      %v1002 = vsub.s32 0, %v1001
      %v1003 = vrot.slane %v998, %v1002
      %v1009 = vunpack.c.l.b16 %v994
      %v1010 = vunpack.c.l.b16 %v995
      %v1011 = vunpack.c.l.b16 %v996
      %v1012 = vunpack.c.l.b16 %v997
      %v1013 = vpack.c.b16 %v1010, %v1009
      %v1014 = vpack.c.b16 %v1012, %v1011
      %v1018 = vsel %vm714, %v993, 0
      %1020 = vmatprep.subr.bf16.mxu0 0
      %1021 = vmatpush1.bf16.msra.mxu0 %v1013
      %1022 = vmatprep.subr.bf16.mxu0 0
      %1023 = vmatpush1.bf16.msra.mxu0 %v1014
      %1024 = vmatprep.subr.bf16.mxu0 0
      %1025 = vmatpush1.bf16.msra.mxu0 0
      %1026 = vmatprep.subr.bf16.mxu0 0
      %1027 = vmatpush1.bf16.msra.mxu0 0
      %1028 = vmatprep.subr.bf16.mxu0 0
      %1029 = vmatpush1.bf16.msra.mxu0 0
      %1030 = vmatprep.subr.bf16.mxu0 0
      %1031 = vmatpush1.bf16.msra.mxu0 0
      %1032 = vmatprep.subr.bf16.mxu0 0
      %1033 = vmatpush1.bf16.msra.mxu0 0
      %1034 = vmatprep.subr.bf16.mxu0 0
      %1035 = vmatpush1.bf16.msra.mxu0 0
      %1036 = vmatprep.subr.bf16.mxu0 0
      %1037 = vmatpush1.bf16.msra.mxu0 0
      %1038 = vmatprep.subr.bf16.mxu0 0
      %1039 = vmatpush1.bf16.msra.mxu0 0
      %1040 = vmatprep.subr.bf16.mxu0 0
      %1041 = vmatpush1.bf16.msra.mxu0 0
      %1042 = vmatprep.subr.bf16.mxu0 0
      %1043 = vmatpush1.bf16.msra.mxu0 0
      %1044 = vmatprep.subr.bf16.mxu0 0
      %1045 = vmatpush1.bf16.msra.mxu0 0
      %1046 = vmatprep.subr.bf16.mxu0 0
      %1047 = vmatpush1.bf16.msra.mxu0 0
      %1048 = vmatprep.subr.bf16.mxu0 0
      %1049 = vmatpush1.bf16.msra.mxu0 0
      %1050 = vmatprep.subr.bf16.mxu0 0
      %1051 = vmatpush1.bf16.msra.mxu0 0
      %1052 = vmatprep.mubr.bf16.mxu0 0
      %1053 = vmatmul.mubr.bf16.gmra.mrb[0].mxu0 %v1018
      %v1054 = vpop.f32.mrb[0].mxu0
      %v1055 = vadd.f32 %v1003, %v1054
      %v1056 = vpop.f32.mrb[0].mxu0
      %v1057 = vpop.f32.mrb[0].mxu0
      %v1058 = vpop.f32.mrb[0].mxu0
      %1059 = vdwg.mxu0
      %v1060 = vadd.f32 %v1055, %v689
      %v1061 = vsel %vm714, %v1060, 0.0
      %1062 = vadd.xlane.f32.xlu0 %v1061
      %v1063 = vpop.xlane.xlu0 %1062
      %v1064 = vrcp.pop 32.0
      %v1065 = vmul.f32 %v1063, %v1064
      %v1066 = vmul.f32 %v1060, %v1060
      %v1067 = vsel %vm714, %v1066, 0.0
      %1068 = vadd.xlane.f32.xlu0 %v1067
      %v1069 = vpop.xlane.xlu0 %1068
      %v1070 = vmul.f32 %v1069, %v1064
      %v1071 = vmul.f32 %v1065, %v1065
      %v1072 = vsub.f32 %v1070, %v1071
      %v1073 = vsub.f32 %v1060, %v1065
      %v1074 = vadd.f32 %v1072, 1e-05
      %v1075 = vrsqrt.pop %v1074
      %v1076 = vmul.f32 %v1073, %v1075
      %v1077 = vld [vmem:[%s651] sm:$0x1]
      %v1079 = vlaneseq
      %v1080 = vshrl.u32 %v1079, 7
      %v1081 = vsub.s32 0, %v1080
      %v1082 = vrot.slane %v1077, %v1081
      %v1084 = vmul.f32 %v1076, %v1082
      %v1085 = vld [vmem:[%s654] sm:$0x1]
      %v1087 = vlaneseq
      %v1088 = vshrl.u32 %v1087, 7
      %v1089 = vsub.s32 0, %v1088
      %v1090 = vrot.slane %v1085, %v1089
      %v1092 = vadd.f32 %v1084, %v1090
      %v1093 = vpack.c.bf16 %v1092, %v1092
      %v1094 = vld [vmem:[%s659] sm:$0xf]
      %v1095 = vld [vmem:[%s659 + $0x4] sm:$0xf]
      %v1096 = vld [vmem:[%s659 + $0x8] sm:$0xf]
      %v1097 = vld [vmem:[%s659 + $0xc] sm:$0xf]
      %v1098 = vld [vmem:[%s662] sm:$0x1]
      %v1100 = vlaneseq
      %v1101 = vshrl.u32 %v1100, 7
      %v1102 = vsub.s32 0, %v1101
      %v1103 = vrot.slane %v1098, %v1102
      %v1109 = vunpack.c.l.b16 %v1094
      %v1110 = vunpack.c.l.b16 %v1095
      %v1111 = vunpack.c.l.b16 %v1096
      %v1112 = vunpack.c.l.b16 %v1097
      %v1113 = vpack.c.b16 %v1110, %v1109
      %v1114 = vpack.c.b16 %v1112, %v1111
      %v1118 = vsel %vm714, %v1093, 0
      %1120 = vmatprep.subr.bf16.mxu0 0
      %1121 = vmatpush1.bf16.msra.mxu0 %v1113
      %1122 = vmatprep.subr.bf16.mxu0 0
      %1123 = vmatpush1.bf16.msra.mxu0 %v1114
      %1124 = vmatprep.subr.bf16.mxu0 0
      %1125 = vmatpush1.bf16.msra.mxu0 0
      %1126 = vmatprep.subr.bf16.mxu0 0
      %1127 = vmatpush1.bf16.msra.mxu0 0
      %1128 = vmatprep.subr.bf16.mxu0 0
      %1129 = vmatpush1.bf16.msra.mxu0 0
      %1130 = vmatprep.subr.bf16.mxu0 0
      %1131 = vmatpush1.bf16.msra.mxu0 0
      %1132 = vmatprep.subr.bf16.mxu0 0
      %1133 = vmatpush1.bf16.msra.mxu0 0
      %1134 = vmatprep.subr.bf16.mxu0 0
      %1135 = vmatpush1.bf16.msra.mxu0 0
      %1136 = vmatprep.subr.bf16.mxu0 0
      %1137 = vmatpush1.bf16.msra.mxu0 0
      %1138 = vmatprep.subr.bf16.mxu0 0
      %1139 = vmatpush1.bf16.msra.mxu0 0
      %1140 = vmatprep.subr.bf16.mxu0 0
      %1141 = vmatpush1.bf16.msra.mxu0 0
      %1142 = vmatprep.subr.bf16.mxu0 0
      %1143 = vmatpush1.bf16.msra.mxu0 0
      %1144 = vmatprep.subr.bf16.mxu0 0
      %1145 = vmatpush1.bf16.msra.mxu0 0
      %1146 = vmatprep.subr.bf16.mxu0 0
      %1147 = vmatpush1.bf16.msra.mxu0 0
      %1148 = vmatprep.subr.bf16.mxu0 0
      %1149 = vmatpush1.bf16.msra.mxu0 0
      %1150 = vmatprep.subr.bf16.mxu0 0
      %1151 = vmatpush1.bf16.msra.mxu0 0
      %1152 = vmatprep.mubr.bf16.mxu0 0
      %1153 = vmatmul.mubr.bf16.gmra.mrb[0].mxu0 %v1118
      %v1154 = vpop.f32.mrb[0].mxu0
      %v1155 = vadd.f32 %v1103, %v1154
      %v1156 = vpop.f32.mrb[0].mxu0
      %v1157 = vpop.f32.mrb[0].mxu0
      %v1158 = vpop.f32.mrb[0].mxu0
      %1159 = vdwg.mxu0
      %v1160 = vmax.f32 %v1155, 0.0
      %v1161 = vpack.c.bf16 %v1160, %v1160
      %v1162 = vld [vmem:[%s667] sm:$0xf]
      %v1163 = vld [vmem:[%s667 + $0x4] sm:$0xf]
      %v1164 = vld [vmem:[%s667 + $0x8] sm:$0xf]
      %v1165 = vld [vmem:[%s667 + $0xc] sm:$0xf]
      %v1166 = vld [vmem:[%s667 + $0x10] sm:$0xf]
      %v1167 = vld [vmem:[%s667 + $0x14] sm:$0xf]
      %v1168 = vld [vmem:[%s667 + $0x18] sm:$0xf]
      %v1169 = vld [vmem:[%s667 + $0x1c] sm:$0xf]
      %v1170 = vld [vmem:[%s670] sm:$0x1]
      %v1172 = vlaneseq
      %v1173 = vshrl.u32 %v1172, 7
      %v1174 = vsub.s32 0, %v1173
      %v1175 = vrot.slane %v1170, %v1174
      %v1185 = vunpack.c.l.b16 %v1162
      %v1186 = vunpack.c.l.b16 %v1163
      %v1187 = vunpack.c.l.b16 %v1164
      %v1188 = vunpack.c.l.b16 %v1165
      %v1189 = vunpack.c.l.b16 %v1166
      %v1190 = vunpack.c.l.b16 %v1167
      %v1191 = vunpack.c.l.b16 %v1168
      %v1192 = vunpack.c.l.b16 %v1169
      %v1193 = vpack.c.b16 %v1186, %v1185
      %v1194 = vpack.c.b16 %v1188, %v1187
      %v1195 = vpack.c.b16 %v1190, %v1189
      %v1196 = vpack.c.b16 %v1192, %v1191
      %vm1201 = vcmask 523264
      %v1203 = vsel %vm1201, %v1161, 0
      %1205 = vmatprep.subr.bf16.mxu0 0
      %1206 = vmatpush1.bf16.msra.mxu0 %v1193
      %1207 = vmatprep.subr.bf16.mxu0 0
      %1208 = vmatpush1.bf16.msra.mxu0 %v1194
      %1209 = vmatprep.subr.bf16.mxu0 0
      %1210 = vmatpush1.bf16.msra.mxu0 %v1195
      %1211 = vmatprep.subr.bf16.mxu0 0
      %1212 = vmatpush1.bf16.msra.mxu0 %v1196
      %1213 = vmatprep.subr.bf16.mxu0 0
      %1214 = vmatpush1.bf16.msra.mxu0 0
      %1215 = vmatprep.subr.bf16.mxu0 0
      %1216 = vmatpush1.bf16.msra.mxu0 0
      %1217 = vmatprep.subr.bf16.mxu0 0
      %1218 = vmatpush1.bf16.msra.mxu0 0
      %1219 = vmatprep.subr.bf16.mxu0 0
      %1220 = vmatpush1.bf16.msra.mxu0 0
      %1221 = vmatprep.subr.bf16.mxu0 0
      %1222 = vmatpush1.bf16.msra.mxu0 0
      %1223 = vmatprep.subr.bf16.mxu0 0
      %1224 = vmatpush1.bf16.msra.mxu0 0
      %1225 = vmatprep.subr.bf16.mxu0 0
      %1226 = vmatpush1.bf16.msra.mxu0 0
      %1227 = vmatprep.subr.bf16.mxu0 0
      %1228 = vmatpush1.bf16.msra.mxu0 0
      %1229 = vmatprep.subr.bf16.mxu0 0
      %1230 = vmatpush1.bf16.msra.mxu0 0
      %1231 = vmatprep.subr.bf16.mxu0 0
      %1232 = vmatpush1.bf16.msra.mxu0 0
      %1233 = vmatprep.subr.bf16.mxu0 0
      %1234 = vmatpush1.bf16.msra.mxu0 0
      %1235 = vmatprep.subr.bf16.mxu0 0
      %1236 = vmatpush1.bf16.msra.mxu0 0
      %1237 = vmatprep.mubr.bf16.mxu0 0
      %1238 = vmatmul.mubr.bf16.gmra.mrb[0].mxu0 %v1203
      %v1239 = vpop.f32.mrb[0].mxu0
      %v1240 = vadd.f32 %v1175, %v1239
      %v1241 = vpop.f32.mrb[0].mxu0
      %v1242 = vpop.f32.mrb[0].mxu0
      %v1243 = vpop.f32.mrb[0].mxu0
      %1244 = vdwg.mxu0
      %v1245 = vadd.f32 %v1240, %v1092
      %v1246 = vsel %vm714, %v1245, 0.0
      %1247 = vadd.xlane.f32.xlu0 %v1246
      %v1248 = vpop.xlane.xlu0 %1247
      %v1249 = vmul.f32 %v1248, %v1064
      %v1250 = vmul.f32 %v1245, %v1245
      %v1251 = vsel %vm714, %v1250, 0.0
      %1252 = vadd.xlane.f32.xlu0 %v1251
      %v1253 = vpop.xlane.xlu0 %1252
      %v1254 = vmul.f32 %v1253, %v1064
      %v1255 = vmul.f32 %v1249, %v1249
      %v1256 = vsub.f32 %v1254, %v1255
      %v1257 = vsub.f32 %v1245, %v1249
      %v1258 = vadd.f32 %v1256, 1e-05
      %v1259 = vrsqrt.pop %v1258
      %v1260 = vmul.f32 %v1257, %v1259
      %v1261 = vld [vmem:[%s673] sm:$0x1]
      %v1263 = vlaneseq
      %v1264 = vshrl.u32 %v1263, 7
      %v1265 = vsub.s32 0, %v1264
      %v1266 = vrot.slane %v1261, %v1265
      %v1268 = vmul.f32 %v1260, %v1266
      %v1269 = vld [vmem:[%s676] sm:$0x1]
      %v1271 = vlaneseq
      %v1272 = vshrl.u32 %v1271, 7
      %v1273 = vsub.s32 0, %v1272
      %v1274 = vrot.slane %v1269, %v1273
      %v1276 = vadd.f32 %v1268, %v1274
      %1277 = vst.msk [vmem:[%s680] sm:$0xff] %vm714, %v1276
      %p1278 = scmp.lt.s32.totalorder %s29, 1
      %s1279 = scalar_select %p1278, %s29, 1
      %s1280 = smul.addr %s1279, 8
      %s1281 = scalar_lea.vmem %s14, %s1280
      // Predicated region
      $region81: #{encoder_forward.1} parent=75 // pred_check
        %p1282 = pneg %p419
      $region82: #{encoder_forward.1} parent=75 // pred_check_branch
        %1284 = sbr.rel (%p1282) target = $region84
      $region83: #{encoder_forward.1} parent=75 // pred_region
        _
      $region84: #{encoder_forward.1} parent=75 // pred_fallthru
        _
    $region76: #{encoder_forward.1} parent=5 // pred_fallthru
      _
    %p1285 = scmp.le.s32.totalorder 2, %s20
    // Predicated region
    $region85: #{encoder_forward.1} parent=5 // pred_check
      %p1286 = pneg %p1285
    $region86: #{encoder_forward.1} parent=5 // pred_check_branch
      %1288 = sbr.rel (%p1286) target = $region88
    $region87: #{encoder_forward.1} parent=5 // pred_region
      %s1289 = ssub.s32 %s20, 2
      // Predicated region
      $region89: #{encoder_forward.1} parent=87 // pred_check
        %p1290 = pneg %p425
      $region90: #{encoder_forward.1} parent=87 // pred_check_branch
        %1292 = sbr.rel (%p1290) target = $region92
      $region91: #{encoder_forward.1} parent=87 // pred_region
        %p1293 = scmp.lt.s32.totalorder %s31, 1
        %s1294 = scalar_select %p1293, %s31, 1
        %s1295 = smul.addr %s1294, 8
        %s1296 = scalar_lea.vmem %s14, %s1295
      $region92: #{encoder_forward.1} parent=87 // pred_fallthru
        _
    $region88: #{encoder_forward.1} parent=5 // pred_fallthru
      _
  $region6: #{encoder_forward.1} parent=0 // loop_footer
    %s24 = sadd.s32 1, %s20
  $region7: #{encoder_forward.1} parent=0 // loop_footer_branch
    %19 = sbr.rel target = $region3
  $region8: #{encoder_forward.1} parent=0 // loop_exit
    _

</llo_original>
